<compile_context>
chip_gen: v7x
topology: tpu7x:2x2x1
jax: 0.10.0
libtpu: 0.0.40
codegen_flags: <defaults>
</compile_context>

<pallas_src>
import math
import numpy as np
import jax
import jax.numpy as jnp
from jax.experimental import pallas as pl
from jax.experimental.pallas import tpu as pltpu

# ---- small, module-consistent shapes ----
SEQ = 8            # seq_len (batch dim of the bmm)
PATCH = 16         # patch_numbers (attention positions)
C = 32             # trans_linear_in_dim (channel)
C_HALF = C // 2    # sub_linear hidden dim
N = SEQ * PATCH    # flattened rows = 128 (one full lane width)
PE_SCALE = 0.1
NEG_BIG = -1.0e12       # DropKey additive constant from the PyTorch code
NEG_OFFBLOCK = -1.0e30  # large finite off-block mask (NOT -inf, avoids NaN in max-subtract)


# ---------------------------------------------------------------------------
# Pallas kernel: whole forward pass, one invocation, no grid.
# All arrays live in VMEM (<250 KB total); gamma is an SMEM scalar.
# ---------------------------------------------------------------------------
def _spatial_attention_kernel(x_ref, pe_ref, mask_ref, gamma_ref,
                              wqkv_ref, bqkv_ref,
                              w1_ref, b1_ref, w2_ref, b2_ref, w3_ref, b3_ref,
                              out_ref, amap_ref):
    # Positional encoding (already broadcast to [N, C] by the wrapper).
    x = x_ref[...] + pe_ref[...]                                  # [128, 32]
    residual = x

    # Fused Q|K|V projection; softmax scale already folded into the Q columns.
    qkv = jnp.dot(x, wqkv_ref[...],
                  preferred_element_type=jnp.float32) + bqkv_ref[...]   # [128, 96]
    q = qkv[:, :C]
    k = qkv[:, C:2 * C]
    v = qkv[:, 2 * C:]

    # Block-diagonal attention: one full-width 128x128 matmul; off-block entries are
    # killed by the -1e30 additive mask, on-block entries carry the DropKey -1e12 terms.
    s = jnp.einsum('qd,kd->qk', q, k,
                   preferred_element_type=jnp.float32) + mask_ref[...]  # [128, 128]

    # Safe softmax over the full 128 lanes (== per-block softmax, since off-block exp -> 0).
    m = jnp.max(s, axis=-1, keepdims=True)
    e = jnp.exp(s - m)
    inv = pl.reciprocal(jnp.sum(e, axis=-1, keepdims=True), approx=False)
    att = e * inv
    amap_ref[...] = att                                            # lane-dense [128, 128] store

    ctx = jnp.dot(att, v, preferred_element_type=jnp.float32)      # [128, 32]
    out = gamma_ref[0] * ctx + residual                            # [128, 32]

    # sub_linear MLP + residual.
    h = jnp.maximum(jnp.dot(out, w1_ref[...],
                            preferred_element_type=jnp.float32) + b1_ref[...], 0.0)
    h = jnp.maximum(jnp.dot(h, w2_ref[...],
                            preferred_element_type=jnp.float32) + b2_ref[...], 0.0)
    h = jnp.dot(h, w3_ref[...], preferred_element_type=jnp.float32) + b3_ref[...]
    out_ref[...] = h + out


# ---------------------------------------------------------------------------
# Wrapper: host-side layout plumbing (free XLA reshapes) + pallas_call
# ---------------------------------------------------------------------------
def _build_combined_mask(drop_add):
    """[SEQ, PATCH, PATCH] DropKey mask -> [N, N] block-diagonal additive mask."""
    idx = jnp.arange(SEQ)
    combined = jnp.full((SEQ, PATCH, SEQ, PATCH), NEG_OFFBLOCK, jnp.float32)
    combined = combined.at[idx, :, idx, :].set(drop_add)
    return combined.reshape(N, N)


def spatial_attention_forward(x, pe, drop_add, gamma, params):
    wq, bq, wk, bk, wv, bv, w1, b1, w2, b2, w3, b3 = params

    # Fold the softmax scale into the Q projection and fuse Q|K|V.
    scale = jnp.float32(PATCH ** (-0.5))
    wqkv = jnp.concatenate([wq * scale, wk, wv], axis=1)          # [C, 3C]
    bqkv = jnp.concatenate([bq * scale, bk, bv], axis=1)          # [1, 3C]

    x2 = x.reshape(N, C)                                          # metadata-only reshape
    pe2 = jnp.tile(pe[0, :PATCH], (SEQ, 1))                       # [N, C]
    mask_full = _build_combined_mask(drop_add)                    # [N, N]

    vmem = pl.BlockSpec(memory_space=pltpu.MemorySpace.VMEM)
    smem = pl.BlockSpec(memory_space=pltpu.MemorySpace.SMEM)

    out2, amap_full = pl.pallas_call(
        _spatial_attention_kernel,
        out_shape=(jax.ShapeDtypeStruct((N, C), jnp.float32),
                   jax.ShapeDtypeStruct((N, N), jnp.float32)),
        in_specs=[vmem, vmem, vmem, smem] + [vmem] * 8,
        out_specs=(vmem, vmem),
        cost_estimate=pl.CostEstimate(flops=3_300_000,
                                      transcendentals=N * N,
                                      bytes_accessed=200_000),
    )(x2, pe2, mask_full, gamma, wqkv, bqkv, w1, b1, w2, b2, w3, b3)

    out = out2.reshape(SEQ, PATCH, C)
    idx = jnp.arange(SEQ)
    amap = amap_full.reshape(SEQ, PATCH, SEQ, PATCH)[idx, :, idx, :]   # diag blocks, exact
    return out, amap


# ---------------------------------------------------------------------------
# Glue: positional-encoding table and deterministic parameter init (plain JAX)
# ---------------------------------------------------------------------------
def positional_encoding(max_len, d_model, scale=PE_SCALE):
    pos = jnp.arange(max_len, dtype=jnp.float32)[:, None]
    div = jnp.exp(jnp.arange(0, d_model, 2, dtype=jnp.float32)
                  * (-math.log(10000.0) / d_model))
    pe_sin = jnp.sin(pos * div) * scale
    pe_cos = jnp.cos(pos * div) * scale
    pe = jnp.stack([pe_sin, pe_cos], axis=-1).reshape(max_len, d_model)
    return pe[None]                                   # [1, max_len, d_model]


def init_params(key):
    # nn.Linear(in, out) default init, weights stored transposed as [in, out].
    def linear(k, fin, fout):
        kw, kb = jax.random.split(k)
        bound = 1.0 / math.sqrt(fin)
        w = jax.random.uniform(kw, (fin, fout), jnp.float32, -bound, bound)
        b = jax.random.uniform(kb, (1, fout), jnp.float32, -bound, bound)
        return w, b
    ks = jax.random.split(key, 6)
    wq, bq = linear(ks[0], C, C)
    wk, bk = linear(ks[1], C, C)
    wv, bv = linear(ks[2], C, C)
    w1, b1 = linear(ks[3], C, C_HALF)
    w2, b2 = linear(ks[4], C_HALF, C_HALF)
    w3, b3 = linear(ks[5], C_HALF, C)
    return (wq, bq, wk, bk, wv, bv, w1, b1, w2, b2, w3, b3)


# ---------------------------------------------------------------------------
# Pure-JAX reference (mirrors the PyTorch forward) for validation
# ---------------------------------------------------------------------------
def spatial_attention_ref(x, pe, drop_add, gamma, params):
    wq, bq, wk, bk, wv, bv, w1, b1, w2, b2, w3, b3 = params
    x = x + pe[:, :x.shape[1]]
    residual = x
    Q = x @ wq + bq
    K = x @ wk + bk
    V = x @ wv + bv
    attn = jnp.einsum('bqd,bkd->bqk', Q * (x.shape[1] ** (-0.5)), K)
    attn = attn + drop_add
    attn_map = jax.nn.softmax(attn, axis=-1)
    att = jax.nn.softmax(attn, axis=-1)
    ctx = jnp.einsum('bqk,bkd->bqd', att, V)
    out = gamma * ctx + residual
    h = jnp.maximum(out @ w1 + b1, 0.0)
    h = jnp.maximum(h @ w2 + b2, 0.0)
    h = h @ w3 + b3
    return h + out, attn_map


if __name__ == "__main__":
    key = jax.random.PRNGKey(0)
    kx, kp, km = jax.random.split(key, 3)

    x = jax.random.normal(kx, (SEQ, PATCH, C), jnp.float32)
    params = init_params(kp)
    pe = positional_encoding(128, C)[:, :PATCH]       # [1, PATCH, C]

    # DropKey: torch.bernoulli(ones * 0.5) * -1e12. The random mask is generated
    # host-side (deterministic via PRNGKey) and passed in so kernel and reference
    # see identical randomness.
    drop_add = jax.random.bernoulli(km, 0.5, (SEQ, PATCH, PATCH)).astype(jnp.float32) * NEG_BIG

    # gamma is a learnable scalar (nn.Parameter(torch.zeros(1)) at init); use a
    # nonzero example value so the attention branch contributes to the output.
    gamma_val = 0.5
    gamma = jnp.full((1,), gamma_val, jnp.float32)

    # TODO(synk): PositionalEncoding dropout (p=0.1) is training-mode only; inference
    # semantics (identity) are implemented here.
    out, amap = spatial_attention_forward(x, pe, drop_add, gamma, params)
    out = jax.block_until_ready(out)
    amap = jax.block_until_ready(amap)

    ref_out, ref_amap = spatial_attention_ref(x, pe, drop_add, gamma_val, params)
    ref_out = jax.block_until_ready(ref_out)

    np.testing.assert_allclose(np.asarray(out), np.asarray(ref_out), atol=2e-2, rtol=2e-2)
    np.testing.assert_allclose(np.asarray(amap), np.asarray(ref_amap), atol=2e-2, rtol=2e-2)
    assert out.shape == (SEQ, PATCH, C) and amap.shape == (SEQ, PATCH, PATCH)
    assert bool(jnp.all(jnp.isfinite(out))) and bool(jnp.all(jnp.isfinite(amap)))
    print("KERNEL_OK")
</pallas_src>

<mosaic_0001>
module attributes {stable_mosaic.version = 11 : i64} {
  func.func @_spatial_attention_kernel(%arg0: memref<128x32xf32, #tpu.memory_space<vmem>>, %arg1: memref<128x32xf32, #tpu.memory_space<vmem>>, %arg2: memref<128x128xf32, #tpu.memory_space<vmem>>, %arg3: memref<1xf32, #tpu.memory_space<smem>>, %arg4: memref<32x96xf32, #tpu.memory_space<vmem>>, %arg5: memref<1x96xf32, #tpu.memory_space<vmem>>, %arg6: memref<32x16xf32, #tpu.memory_space<vmem>>, %arg7: memref<1x16xf32, #tpu.memory_space<vmem>>, %arg8: memref<16x16xf32, #tpu.memory_space<vmem>>, %arg9: memref<1x16xf32, #tpu.memory_space<vmem>>, %arg10: memref<16x32xf32, #tpu.memory_space<vmem>>, %arg11: memref<1x32xf32, #tpu.memory_space<vmem>>, %arg12: memref<128x32xf32, #tpu.memory_space<vmem>>, %arg13: memref<128x128xf32, #tpu.memory_space<vmem>>) attributes {dimension_semantics = [], scalar_prefetch = 0 : i64, scratch_operands = 0 : i64, tpu.core_type = #tpu.core_type<tc>} {
    %c0 = arith.constant 0 : index
    %c0_0 = arith.constant 0 : index
    %0 = vector.load %arg0[%c0, %c0_0] : memref<128x32xf32, #tpu.memory_space<vmem>>, vector<128x32xf32>
    %c0_1 = arith.constant 0 : index
    %c0_2 = arith.constant 0 : index
    %1 = vector.load %arg1[%c0_1, %c0_2] : memref<128x32xf32, #tpu.memory_space<vmem>>, vector<128x32xf32>
    %2 = arith.addf %0, %1 : vector<128x32xf32>
    %c0_3 = arith.constant 0 : index
    %c0_4 = arith.constant 0 : index
    %3 = vector.load %arg4[%c0_3, %c0_4] : memref<32x96xf32, #tpu.memory_space<vmem>>, vector<32x96xf32>
    %cst = arith.constant dense<0.000000e+00> : vector<128x96xf32>
    %4 = tpu.matmul %2, %3, %cst {dimension_numbers = #tpu.dot_dimension_numbers<[1], [0], [0], [1], [0, 0, 1, 1], [], []>} : vector<128x32xf32>, vector<32x96xf32>, vector<128x96xf32> -> vector<128x96xf32>
    %c0_5 = arith.constant 0 : index
    %c0_6 = arith.constant 0 : index
    %5 = vector.load %arg5[%c0_5, %c0_6] : memref<1x96xf32, #tpu.memory_space<vmem>>, vector<1x96xf32>
    %6 = vector.broadcast %5 : vector<1x96xf32> to vector<128x96xf32>
    %7 = arith.addf %4, %6 : vector<128x96xf32>
    %8 = vector.extract_strided_slice %7 {offsets = [0, 0], sizes = [128, 32], strides = [1, 1]} : vector<128x96xf32> to vector<128x32xf32>
    %9 = vector.extract_strided_slice %7 {offsets = [0, 32], sizes = [128, 32], strides = [1, 1]} : vector<128x96xf32> to vector<128x32xf32>
    %10 = vector.extract_strided_slice %7 {offsets = [0, 64], sizes = [128, 32], strides = [1, 1]} : vector<128x96xf32> to vector<128x32xf32>
    "tpu.trace_start"() <{level = 10 : i32, message = "qd,kd->qk"}> : () -> ()
    %cst_7 = arith.constant dense<0.000000e+00> : vector<128x128xf32>
    %11 = tpu.matmul %8, %9, %cst_7 {dimension_numbers = #tpu.dot_dimension_numbers<[1], [1], [0], [0], [0, 0, 1, 0], [], []>} : vector<128x32xf32>, vector<128x32xf32>, vector<128x128xf32> -> vector<128x128xf32>
    "tpu.trace_stop"() : () -> ()
    %c0_8 = arith.constant 0 : index
    %c0_9 = arith.constant 0 : index
    %12 = vector.load %arg2[%c0_8, %c0_9] : memref<128x128xf32, #tpu.memory_space<vmem>>, vector<128x128xf32>
    %13 = arith.addf %11, %12 : vector<128x128xf32>
    %cst_10 = arith.constant dense<0xFF800000> : vector<128xf32>
    %14 = vector.multi_reduction <maximumf>, %13, %cst_10 [1] : vector<128x128xf32> to vector<128xf32>
    %15 = vector.shape_cast %14 : vector<128xf32> to vector<128x1xf32>
    %16 = vector.broadcast %15 : vector<128x1xf32> to vector<128x128xf32>
    %17 = arith.subf %13, %16 : vector<128x128xf32>
    %18 = math.exp %17 : vector<128x128xf32>
    %cst_11 = arith.constant dense<0.000000e+00> : vector<128xf32>
    %19 = vector.multi_reduction <add>, %18, %cst_11 [1] : vector<128x128xf32> to vector<128xf32>
    %20 = vector.shape_cast %19 : vector<128xf32> to vector<128x1xf32>
    %21 = tpu.reciprocal %20 : vector<128x1xf32> -> vector<128x1xf32>
    %22 = vector.broadcast %21 : vector<128x1xf32> to vector<128x128xf32>
    %23 = arith.mulf %18, %22 : vector<128x128xf32>
    %c0_12 = arith.constant 0 : index
    %c0_13 = arith.constant 0 : index
    %24 = vector.load %arg13[%c0_12, %c0_13] : memref<128x128xf32, #tpu.memory_space<vmem>>, vector<128x128xf32>
    tpu.vector_store %arg13[%c0_12, %c0_13], %23 {strides = array<i32>} : memref<128x128xf32, #tpu.memory_space<vmem>>, vector<128x128xf32>,
    %cst_14 = arith.constant dense<0.000000e+00> : vector<128x32xf32>
    %25 = tpu.matmul %23, %10, %cst_14 {dimension_numbers = #tpu.dot_dimension_numbers<[1], [0], [0], [1], [0, 0, 1, 1], [], []>} : vector<128x128xf32>, vector<128x32xf32>, vector<128x32xf32> -> vector<128x32xf32>
    %c0_15 = arith.constant 0 : index
    %26 = memref.load %arg3[%c0_15] : memref<1xf32, #tpu.memory_space<smem>>
    %27 = vector.broadcast %26 : f32 to vector<128x32xf32>
    %28 = arith.mulf %27, %25 : vector<128x32xf32>
    %29 = arith.addf %28, %2 : vector<128x32xf32>
    %c0_16 = arith.constant 0 : index
    %c0_17 = arith.constant 0 : index
    %30 = vector.load %arg6[%c0_16, %c0_17] : memref<32x16xf32, #tpu.memory_space<vmem>>, vector<32x16xf32>
    %cst_18 = arith.constant dense<0.000000e+00> : vector<128x16xf32>
    %31 = tpu.matmul %29, %30, %cst_18 {dimension_numbers = #tpu.dot_dimension_numbers<[1], [0], [0], [1], [0, 0, 1, 1], [], []>} : vector<128x32xf32>, vector<32x16xf32>, vector<128x16xf32> -> vector<128x16xf32>
    %c0_19 = arith.constant 0 : index
    %c0_20 = arith.constant 0 : index
    %32 = vector.load %arg7[%c0_19, %c0_20] : memref<1x16xf32, #tpu.memory_space<vmem>>, vector<1x16xf32>
    %33 = vector.broadcast %32 : vector<1x16xf32> to vector<128x16xf32>
    %34 = arith.addf %31, %33 : vector<128x16xf32>
    %cst_21 = arith.constant 0.000000e+00 : f32
    %35 = vector.broadcast %cst_21 : f32 to vector<128x16xf32>
    %36 = arith.maximumf %34, %35 : vector<128x16xf32>
    %c0_22 = arith.constant 0 : index
    %c0_23 = arith.constant 0 : index
    %37 = vector.load %arg8[%c0_22, %c0_23] : memref<16x16xf32, #tpu.memory_space<vmem>>, vector<16x16xf32>
    %cst_24 = arith.constant dense<0.000000e+00> : vector<128x16xf32>
    %38 = tpu.matmul %36, %37, %cst_24 {dimension_numbers = #tpu.dot_dimension_numbers<[1], [0], [0], [1], [0, 0, 1, 1], [], []>} : vector<128x16xf32>, vector<16x16xf32>, vector<128x16xf32> -> vector<128x16xf32>
    %c0_25 = arith.constant 0 : index
    %c0_26 = arith.constant 0 : index
    %39 = vector.load %arg9[%c0_25, %c0_26] : memref<1x16xf32, #tpu.memory_space<vmem>>, vector<1x16xf32>
    %40 = vector.broadcast %39 : vector<1x16xf32> to vector<128x16xf32>
    %41 = arith.addf %38, %40 : vector<128x16xf32>
    %cst_27 = arith.constant 0.000000e+00 : f32
    %42 = vector.broadcast %cst_27 : f32 to vector<128x16xf32>
    %43 = arith.maximumf %41, %42 : vector<128x16xf32>
    %c0_28 = arith.constant 0 : index
    %c0_29 = arith.constant 0 : index
    %44 = vector.load %arg10[%c0_28, %c0_29] : memref<16x32xf32, #tpu.memory_space<vmem>>, vector<16x32xf32>
    %cst_30 = arith.constant dense<0.000000e+00> : vector<128x32xf32>
    %45 = tpu.matmul %43, %44, %cst_30 {dimension_numbers = #tpu.dot_dimension_numbers<[1], [0], [0], [1], [0, 0, 1, 1], [], []>} : vector<128x16xf32>, vector<16x32xf32>, vector<128x32xf32> -> vector<128x32xf32>
    %c0_31 = arith.constant 0 : index
    %c0_32 = arith.constant 0 : index
    %46 = vector.load %arg11[%c0_31, %c0_32] : memref<1x32xf32, #tpu.memory_space<vmem>>, vector<1x32xf32>
    %47 = vector.broadcast %46 : vector<1x32xf32> to vector<128x32xf32>
    %48 = arith.addf %45, %47 : vector<128x32xf32>
    %49 = arith.addf %48, %29 : vector<128x32xf32>
    %c0_33 = arith.constant 0 : index
    %c0_34 = arith.constant 0 : index
    %50 = vector.load %arg12[%c0_33, %c0_34] : memref<128x32xf32, #tpu.memory_space<vmem>>, vector<128x32xf32>
    tpu.vector_store %arg12[%c0_33, %c0_34], %49 {strides = array<i32>} : memref<128x32xf32, #tpu.memory_space<vmem>>, vector<128x32xf32>,
    return
  }
}

</mosaic_0001>

<llo_original>
// kernel: tpu_custom_call.1
$region0: #{tpu_custom_call.1}
  #allocation0 [shape = 'u32[]', space=smem, size = 0x4, offset = 0x4, fixed_abs, tag = 'smem constant byte address 0x4 - core index']
  #allocation1 [shape = 'u32[144,128]{1,0:T(1,128)}', space=vmem, size = 0x12000, scoped, tag = 'internal scratch']
  #allocation2 [shape = 'f32[1]{0:T(128)S(6)}', space=smem, size = 0x200, scoped, tag = 'scoped memory for tpu_custom_call.1']
  %s0 = inlined_call_operand.vmem [shape: f32[128,32], index: 0, kind: input, shape index: {}]
  %s1 = inlined_call_operand.vmem [shape: f32[128,32], index: 1, kind: input, shape index: {}]
  %s2 = inlined_call_operand.vmem [shape: f32[128,128], index: 2, kind: input, shape index: {}]
  %s3 = inlined_call_operand.<no memory space> [shape: f32[1], index: 3, kind: input, shape index: {}]
  %s4 = inlined_call_operand.vmem [shape: f32[32,96], index: 4, kind: input, shape index: {}]
  %s5 = inlined_call_operand.vmem [shape: f32[1,96], index: 5, kind: input, shape index: {}]
  %s6 = inlined_call_operand.vmem [shape: f32[32,16], index: 6, kind: input, shape index: {}]
  %s7 = inlined_call_operand.vmem [shape: f32[1,16], index: 7, kind: input, shape index: {}]
  %s8 = inlined_call_operand.vmem [shape: f32[16,16], index: 8, kind: input, shape index: {}]
  %s9 = inlined_call_operand.vmem [shape: f32[1,16], index: 9, kind: input, shape index: {}]
  %s10 = inlined_call_operand.vmem [shape: f32[16,32], index: 10, kind: input, shape index: {}]
  %s11 = inlined_call_operand.vmem [shape: f32[1,32], index: 11, kind: input, shape index: {}]
  %s12 = inlined_call_operand.vmem [shape: f32[128,32], index: 12, kind: output, shape index: {0}]
  %s13 = inlined_call_operand.hbm [shape: f32[128,128], index: 13, kind: output, shape index: {1}]
  %14 = xla_tuple %s12, %s13
  %s15 = sld [smem:[#allocation0]]
  $region66: #{tpu_custom_call.1} parent=0
    _
  %s17 = ssub.s32 1, %s15
  %s18 = scalar_select 0, %s17, %s15
  %19 = sst [smem:[#allocation2]] %s3
  $region1: #{tpu_custom_call.1} parent=0
    #allocation3 [shape = 'u8[65536]{0}', space=vmem, size = 0x10000, scoped, tag = 'output window, operand 1, single buffered']
    #allocation4 [shape = 's32[1]{0}', space=sflag, size = 0x4, scoped, tag = 'scoped memory for tpu_custom_call.1']
    %20 = vsyncpa [#allocation4], 0
    // Predicated region
    $region2: #{tpu_custom_call.1} parent=1 // pred_check
      _
    $region3: #{tpu_custom_call.1} parent=1 // pred_check_branch
      %22 = sbr.rel (0) target = $region5
    $region4: #{tpu_custom_call.1} parent=1 // pred_region
      _
    $region5: #{tpu_custom_call.1} parent=1 // pred_fallthru
      _
    // Predicated region
    $region6: #{tpu_custom_call.1} parent=1 // pred_check
      _
    $region7: #{tpu_custom_call.1} parent=1 // pred_check_branch
      %24 = sbr.rel (0) target = $region9
    $region8: #{tpu_custom_call.1} parent=1 // pred_region
      _
    $region9: #{tpu_custom_call.1} parent=1 // pred_fallthru
      _
    // Predicated region
    $region10: #{tpu_custom_call.1} parent=1 // pred_check
      _
    $region11: #{tpu_custom_call.1} parent=1 // pred_check_branch
      %26 = sbr.rel (0) target = $region13
    $region12: #{tpu_custom_call.1} parent=1 // pred_region
      _
    $region13: #{tpu_custom_call.1} parent=1 // pred_fallthru
      _
    // Predicated region
    $region14: #{tpu_custom_call.1} parent=1 // pred_check
      _
    $region15: #{tpu_custom_call.1} parent=1 // pred_check_branch
      %28 = sbr.rel (0) target = $region17
    $region16: #{tpu_custom_call.1} parent=1 // pred_region
      _
    $region17: #{tpu_custom_call.1} parent=1 // pred_fallthru
      _
    // Predicated region
    $region18: #{tpu_custom_call.1} parent=1 // pred_check
      _
    $region19: #{tpu_custom_call.1} parent=1 // pred_check_branch
      %30 = sbr.rel (0) target = $region21
    $region20: #{tpu_custom_call.1} parent=1 // pred_region
      _
    $region21: #{tpu_custom_call.1} parent=1 // pred_fallthru
      _
    // Predicated region
    $region22: #{tpu_custom_call.1} parent=1 // pred_check
      _
    $region23: #{tpu_custom_call.1} parent=1 // pred_check_branch
      %32 = sbr.rel (0) target = $region25
    $region24: #{tpu_custom_call.1} parent=1 // pred_region
      _
    $region25: #{tpu_custom_call.1} parent=1 // pred_fallthru
      _
    // Predicated region
    $region26: #{tpu_custom_call.1} parent=1 // pred_check
      _
    $region27: #{tpu_custom_call.1} parent=1 // pred_check_branch
      %34 = sbr.rel (0) target = $region29
    $region28: #{tpu_custom_call.1} parent=1 // pred_region
      _
    $region29: #{tpu_custom_call.1} parent=1 // pred_fallthru
      _
    // Predicated region
    $region30: #{tpu_custom_call.1} parent=1 // pred_check
      _
    $region31: #{tpu_custom_call.1} parent=1 // pred_check_branch
      %36 = sbr.rel (0) target = $region33
    $region32: #{tpu_custom_call.1} parent=1 // pred_region
      _
    $region33: #{tpu_custom_call.1} parent=1 // pred_fallthru
      _
    // Predicated region
    $region34: #{tpu_custom_call.1} parent=1 // pred_check
      _
    $region35: #{tpu_custom_call.1} parent=1 // pred_check_branch
      %38 = sbr.rel (0) target = $region37
    $region36: #{tpu_custom_call.1} parent=1 // pred_region
      _
    $region37: #{tpu_custom_call.1} parent=1 // pred_fallthru
      _
    // Predicated region
    $region38: #{tpu_custom_call.1} parent=1 // pred_check
      _
    $region39: #{tpu_custom_call.1} parent=1 // pred_check_branch
      %40 = sbr.rel (0) target = $region41
    $region40: #{tpu_custom_call.1} parent=1 // pred_region
      _
    $region41: #{tpu_custom_call.1} parent=1 // pred_fallthru
      _
    // Predicated region
    $region42: #{tpu_custom_call.1} parent=1 // pred_check
      _
    $region43: #{tpu_custom_call.1} parent=1 // pred_check_branch
      %42 = sbr.rel (0) target = $region45
    $region44: #{tpu_custom_call.1} parent=1 // pred_region
      _
    $region45: #{tpu_custom_call.1} parent=1 // pred_fallthru
      _
    // Predicated region
    $region46: #{tpu_custom_call.1} parent=1 // pred_check
      _
    $region47: #{tpu_custom_call.1} parent=1 // pred_check_branch
      %44 = sbr.rel (0) target = $region49
    $region48: #{tpu_custom_call.1} parent=1 // pred_region
      _
    $region49: #{tpu_custom_call.1} parent=1 // pred_fallthru
      _
    %v45 = vld [vmem:[%s0] sm:$0xff]
    %v46 = vld [vmem:[%s0 + $0x8] sm:$0xff]
    %v47 = vld [vmem:[%s0 + $0x10] sm:$0xff]
    %v48 = vld [vmem:[%s0 + $0x18] sm:$0xff]
    %v49 = vld [vmem:[%s0 + $0x20] sm:$0xff]
    %v50 = vld [vmem:[%s0 + $0x28] sm:$0xff]
    %v51 = vld [vmem:[%s0 + $0x30] sm:$0xff]
    %v52 = vld [vmem:[%s0 + $0x38] sm:$0xff]
    %v53 = vld [vmem:[%s0 + $0x40] sm:$0xff]
    %v54 = vld [vmem:[%s0 + $0x48] sm:$0xff]
    %v55 = vld [vmem:[%s0 + $0x50] sm:$0xff]
    %v56 = vld [vmem:[%s0 + $0x58] sm:$0xff]
    %v57 = vld [vmem:[%s0 + $0x60] sm:$0xff]
    %v58 = vld [vmem:[%s0 + $0x68] sm:$0xff]
    %v59 = vld [vmem:[%s0 + $0x70] sm:$0xff]
    %v60 = vld [vmem:[%s0 + $0x78] sm:$0xff]
    %v61 = vld [vmem:[%s1] sm:$0xff]
    %v62 = vld [vmem:[%s1 + $0x8] sm:$0xff]
    %v63 = vld [vmem:[%s1 + $0x10] sm:$0xff]
    %v64 = vld [vmem:[%s1 + $0x18] sm:$0xff]
    %v65 = vld [vmem:[%s1 + $0x20] sm:$0xff]
    %v66 = vld [vmem:[%s1 + $0x28] sm:$0xff]
    %v67 = vld [vmem:[%s1 + $0x30] sm:$0xff]
    %v68 = vld [vmem:[%s1 + $0x38] sm:$0xff]
    %v69 = vld [vmem:[%s1 + $0x40] sm:$0xff]
    %v70 = vld [vmem:[%s1 + $0x48] sm:$0xff]
    %v71 = vld [vmem:[%s1 + $0x50] sm:$0xff]
    %v72 = vld [vmem:[%s1 + $0x58] sm:$0xff]
    %v73 = vld [vmem:[%s1 + $0x60] sm:$0xff]
    %v74 = vld [vmem:[%s1 + $0x68] sm:$0xff]
    %v75 = vld [vmem:[%s1 + $0x70] sm:$0xff]
    %v76 = vld [vmem:[%s1 + $0x78] sm:$0xff]
    %v77 = vadd.f32 %v45, %v61
    %v78 = vadd.f32 %v46, %v62
    %v79 = vadd.f32 %v47, %v63
    %v80 = vadd.f32 %v48, %v64
    %v81 = vadd.f32 %v49, %v65
    %v82 = vadd.f32 %v50, %v66
    %v83 = vadd.f32 %v51, %v67
    %v84 = vadd.f32 %v52, %v68
    %v85 = vadd.f32 %v53, %v69
    %v86 = vadd.f32 %v54, %v70
    %v87 = vadd.f32 %v55, %v71
    %v88 = vadd.f32 %v56, %v72
    %v89 = vadd.f32 %v57, %v73
    %v90 = vadd.f32 %v58, %v74
    %v91 = vadd.f32 %v59, %v75
    %v92 = vadd.f32 %v60, %v76
    %v93 = vld [vmem:[%s4] sm:$0xff]
    %v94 = vld [vmem:[%s4 + $0x8] sm:$0xff]
    %v95 = vld [vmem:[%s4 + $0x10] sm:$0xff]
    %v96 = vld [vmem:[%s4 + $0x18] sm:$0xff]
    %v97 = vld [vmem:[%s5] sm:$0x1]
    %v99 = vlaneseq
    %v100 = vshrl.u32 %v99, 7
    %v101 = vsub.s32 0, %v100
    %v102 = vrot.slane %v97, %v101
    %vm104 = vcmask 261120
    %v106 = vsel %vm104, %v77, 0
    %v109 = vsel %vm104, %v78, 0
    %v112 = vsel %vm104, %v79, 0
    %v115 = vsel %vm104, %v80, 0
    %v118 = vsel %vm104, %v81, 0
    %v121 = vsel %vm104, %v82, 0
    %v124 = vsel %vm104, %v83, 0
    %v127 = vsel %vm104, %v84, 0
    %v130 = vsel %vm104, %v85, 0
    %v133 = vsel %vm104, %v86, 0
    %v136 = vsel %vm104, %v87, 0
    %v139 = vsel %vm104, %v88, 0
    %v142 = vsel %vm104, %v89, 0
    %v145 = vsel %vm104, %v90, 0
    %v148 = vsel %vm104, %v91, 0
    %v151 = vsel %vm104, %v92, 0
    %153 = vmatprep.subr.mxu0 0.0
    %154 = vmatpush1.msra.mxu0 %v93
    %155 = vmatprep.subr.mxu0 0.0
    %156 = vmatpush1.msra.mxu0 %v94
    %157 = vmatprep.subr.mxu0 0.0
    %158 = vmatpush1.msra.mxu0 %v95
    %159 = vmatprep.subr.mxu0 0.0
    %160 = vmatpush1.msra.mxu0 %v96
    %161 = vmatprep.subr.mxu0 0.0
    %162 = vmatpush1.msra.mxu0 0.0
    %163 = vmatprep.subr.mxu0 0.0
    %164 = vmatpush1.msra.mxu0 0.0
    %165 = vmatprep.subr.mxu0 0.0
    %166 = vmatpush1.msra.mxu0 0.0
    %167 = vmatprep.subr.mxu0 0.0
    %168 = vmatpush1.msra.mxu0 0.0
    %169 = vmatprep.subr.mxu0 0.0
    %170 = vmatpush1.msra.mxu0 0.0
    %171 = vmatprep.subr.mxu0 0.0
    %172 = vmatpush1.msra.mxu0 0.0
    %173 = vmatprep.subr.mxu0 0.0
    %174 = vmatpush1.msra.mxu0 0.0
    %175 = vmatprep.subr.mxu0 0.0
    %176 = vmatpush1.msra.mxu0 0.0
    %177 = vmatprep.subr.mxu0 0.0
    %178 = vmatpush1.msra.mxu0 0.0
    %179 = vmatprep.subr.mxu0 0.0
    %180 = vmatpush1.msra.mxu0 0.0
    %181 = vmatprep.subr.mxu0 0.0
    %182 = vmatpush1.msra.mxu0 0.0
    %183 = vmatprep.subr.mxu0 0.0
    %184 = vmatpush1.msra.mxu0 0.0
    %185 = vmatprep.subr.mxu0 0.0
    %186 = vmatpush1.msra.mxu0 0.0
    %187 = vmatprep.subr.mxu0 0.0
    %188 = vmatpush1.msra.mxu0 0.0
    %189 = vmatprep.subr.mxu0 0.0
    %190 = vmatpush1.msra.mxu0 0.0
    %191 = vmatprep.subr.mxu0 0.0
    %192 = vmatpush1.msra.mxu0 0.0
    %193 = vmatprep.subr.mxu0 0.0
    %194 = vmatpush1.msra.mxu0 0.0
    %195 = vmatprep.subr.mxu0 0.0
    %196 = vmatpush1.msra.mxu0 0.0
    %197 = vmatprep.subr.mxu0 0.0
    %198 = vmatpush1.msra.mxu0 0.0
    %199 = vmatprep.subr.mxu0 0.0
    %200 = vmatpush1.msra.mxu0 0.0
    %201 = vmatprep.subr.mxu0 0.0
    %202 = vmatpush1.msra.mxu0 0.0
    %203 = vmatprep.subr.mxu0 0.0
    %204 = vmatpush1.msra.mxu0 0.0
    %205 = vmatprep.subr.mxu0 0.0
    %206 = vmatpush1.msra.mxu0 0.0
    %207 = vmatprep.subr.mxu0 0.0
    %208 = vmatpush1.msra.mxu0 0.0
    %209 = vmatprep.subr.mxu0 0.0
    %210 = vmatpush1.msra.mxu0 0.0
    %211 = vmatprep.subr.mxu0 0.0
    %212 = vmatpush1.msra.mxu0 0.0
    %213 = vmatprep.subr.mxu0 0.0
    %214 = vmatpush1.msra.mxu0 0.0
    %215 = vmatprep.subr.mxu0 0.0
    %216 = vmatpush1.msra.mxu0 0.0
    %217 = vmatprep.mubr.f32.mxu0 0.0
    %218 = vmatmul.mubr.f32.gmra.mrb[0].mxu0 %v106
    %v219 = vpop.f32.mrb[0].mxu0
    %v220 = vadd.f32 %v102, %v219
    %v221 = vpop.f32.mrb[0].mxu0
    %222 = vmatprep.mubr.f32.mxu0 0.0
    %223 = vmatmul.mubr.f32.gmra.mrb[0].mxu0 %v109
    %v224 = vpop.f32.mrb[0].mxu0
    %v225 = vadd.f32 %v102, %v224
    %v226 = vpop.f32.mrb[0].mxu0
    %227 = vmatprep.mubr.f32.mxu0 0.0
    %228 = vmatmul.mubr.f32.gmra.mrb[0].mxu0 %v112
    %v229 = vpop.f32.mrb[0].mxu0
    %v230 = vadd.f32 %v102, %v229
    %v231 = vpop.f32.mrb[0].mxu0
    %232 = vmatprep.mubr.f32.mxu0 0.0
    %233 = vmatmul.mubr.f32.gmra.mrb[0].mxu0 %v115
    %v234 = vpop.f32.mrb[0].mxu0
    %v235 = vadd.f32 %v102, %v234
    %v236 = vpop.f32.mrb[0].mxu0
    %237 = vmatprep.mubr.f32.mxu0 0.0
    %238 = vmatmul.mubr.f32.gmra.mrb[0].mxu0 %v118
    %v239 = vpop.f32.mrb[0].mxu0
    %v240 = vadd.f32 %v102, %v239
    %v241 = vpop.f32.mrb[0].mxu0
    %242 = vmatprep.mubr.f32.mxu0 0.0
    %243 = vmatmul.mubr.f32.gmra.mrb[0].mxu0 %v121
    %v244 = vpop.f32.mrb[0].mxu0
    %v245 = vadd.f32 %v102, %v244
    %v246 = vpop.f32.mrb[0].mxu0
    %247 = vmatprep.mubr.f32.mxu0 0.0
    %248 = vmatmul.mubr.f32.gmra.mrb[0].mxu0 %v124
    %v249 = vpop.f32.mrb[0].mxu0
    %v250 = vadd.f32 %v102, %v249
    %v251 = vpop.f32.mrb[0].mxu0
    %252 = vmatprep.mubr.f32.mxu0 0.0
    %253 = vmatmul.mubr.f32.gmra.mrb[0].mxu0 %v127
    %v254 = vpop.f32.mrb[0].mxu0
    %v255 = vadd.f32 %v102, %v254
    %v256 = vpop.f32.mrb[0].mxu0
    %257 = vmatprep.mubr.f32.mxu0 0.0
    %258 = vmatmul.mubr.f32.gmra.mrb[0].mxu0 %v130
    %v259 = vpop.f32.mrb[0].mxu0
    %v260 = vadd.f32 %v102, %v259
    %v261 = vpop.f32.mrb[0].mxu0
    %262 = vmatprep.mubr.f32.mxu0 0.0
    %263 = vmatmul.mubr.f32.gmra.mrb[0].mxu0 %v133
    %v264 = vpop.f32.mrb[0].mxu0
    %v265 = vadd.f32 %v102, %v264
    %v266 = vpop.f32.mrb[0].mxu0
    %267 = vmatprep.mubr.f32.mxu0 0.0
    %268 = vmatmul.mubr.f32.gmra.mrb[0].mxu0 %v136
    %v269 = vpop.f32.mrb[0].mxu0
    %v270 = vadd.f32 %v102, %v269
    %v271 = vpop.f32.mrb[0].mxu0
    %272 = vmatprep.mubr.f32.mxu0 0.0
    %273 = vmatmul.mubr.f32.gmra.mrb[0].mxu0 %v139
    %v274 = vpop.f32.mrb[0].mxu0
    %v275 = vadd.f32 %v102, %v274
    %v276 = vpop.f32.mrb[0].mxu0
    %277 = vmatprep.mubr.f32.mxu0 0.0
    %278 = vmatmul.mubr.f32.gmra.mrb[0].mxu0 %v142
    %v279 = vpop.f32.mrb[0].mxu0
    %v280 = vadd.f32 %v102, %v279
    %v281 = vpop.f32.mrb[0].mxu0
    %282 = vmatprep.mubr.f32.mxu0 0.0
    %283 = vmatmul.mubr.f32.gmra.mrb[0].mxu0 %v145
    %v284 = vpop.f32.mrb[0].mxu0
    %v285 = vadd.f32 %v102, %v284
    %v286 = vpop.f32.mrb[0].mxu0
    %287 = vmatprep.mubr.f32.mxu0 0.0
    %288 = vmatmul.mubr.f32.gmra.mrb[0].mxu0 %v148
    %v289 = vpop.f32.mrb[0].mxu0
    %v290 = vadd.f32 %v102, %v289
    %v291 = vpop.f32.mrb[0].mxu0
    %292 = vmatprep.mubr.f32.mxu0 0.0
    %293 = vmatmul.mubr.f32.gmra.mrb[0].mxu0 %v151
    %v294 = vpop.f32.mrb[0].mxu0
    %v295 = vadd.f32 %v102, %v294
    %v296 = vpop.f32.mrb[0].mxu0
    %297 = vdwg.mxu0
    %v298 = vld [vmem:[%s2] sm:$0xff]
    %v299 = vld [vmem:[%s2 + $0x8] sm:$0xff]
    %v300 = vld [vmem:[%s2 + $0x10] sm:$0xff]
    %v301 = vld [vmem:[%s2 + $0x18] sm:$0xff]
    %v302 = vld [vmem:[%s2 + $0x20] sm:$0xff]
    %v303 = vld [vmem:[%s2 + $0x28] sm:$0xff]
    %v304 = vld [vmem:[%s2 + $0x30] sm:$0xff]
    %v305 = vld [vmem:[%s2 + $0x38] sm:$0xff]
    %v306 = vld [vmem:[%s2 + $0x40] sm:$0xff]
    %v307 = vld [vmem:[%s2 + $0x48] sm:$0xff]
    %v308 = vld [vmem:[%s2 + $0x50] sm:$0xff]
    %v309 = vld [vmem:[%s2 + $0x58] sm:$0xff]
    %v310 = vld [vmem:[%s2 + $0x60] sm:$0xff]
    %v311 = vld [vmem:[%s2 + $0x68] sm:$0xff]
    %v312 = vld [vmem:[%s2 + $0x70] sm:$0xff]
    %v313 = vld [vmem:[%s2 + $0x78] sm:$0xff]
    %330 = vrot.lane.b32.xlu0 %v220, 96
    %v331 = vpop.permute.xlu0 %330
    %332 = vrot.lane.b32.xlu0 %v225, 96
    %v333 = vpop.permute.xlu0 %332
    %334 = vrot.lane.b32.xlu0 %v230, 96
    %v335 = vpop.permute.xlu0 %334
    %336 = vrot.lane.b32.xlu0 %v235, 96
    %v337 = vpop.permute.xlu0 %336
    %338 = vrot.lane.b32.xlu0 %v240, 96
    %v339 = vpop.permute.xlu0 %338
    %340 = vrot.lane.b32.xlu0 %v245, 96
    %v341 = vpop.permute.xlu0 %340
    %342 = vrot.lane.b32.xlu0 %v250, 96
    %v343 = vpop.permute.xlu0 %342
    %344 = vrot.lane.b32.xlu0 %v255, 96
    %v345 = vpop.permute.xlu0 %344
    %346 = vrot.lane.b32.xlu0 %v260, 96
    %v347 = vpop.permute.xlu0 %346
    %348 = vrot.lane.b32.xlu0 %v265, 96
    %v349 = vpop.permute.xlu0 %348
    %350 = vrot.lane.b32.xlu0 %v270, 96
    %v351 = vpop.permute.xlu0 %350
    %352 = vrot.lane.b32.xlu0 %v275, 96
    %v353 = vpop.permute.xlu0 %352
    %354 = vrot.lane.b32.xlu0 %v280, 96
    %v355 = vpop.permute.xlu0 %354
    %356 = vrot.lane.b32.xlu0 %v285, 96
    %v357 = vpop.permute.xlu0 %356
    %358 = vrot.lane.b32.xlu0 %v290, 96
    %v359 = vpop.permute.xlu0 %358
    %360 = vrot.lane.b32.xlu0 %v295, 96
    %v361 = vpop.permute.xlu0 %360
    %v362 = vsel %vm104, %v220, 0
    %v364 = vsel %vm104, %v225, 0
    %v366 = vsel %vm104, %v230, 0
    %v368 = vsel %vm104, %v235, 0
    %v370 = vsel %vm104, %v240, 0
    %v372 = vsel %vm104, %v245, 0
    %v374 = vsel %vm104, %v250, 0
    %v376 = vsel %vm104, %v255, 0
    %v378 = vsel %vm104, %v260, 0
    %v380 = vsel %vm104, %v265, 0
    %v382 = vsel %vm104, %v270, 0
    %v384 = vsel %vm104, %v275, 0
    %v386 = vsel %vm104, %v280, 0
    %v388 = vsel %vm104, %v285, 0
    %v390 = vsel %vm104, %v290, 0
    %v392 = vsel %vm104, %v295, 0
    %v394 = vsel %vm104, %v331, 0
    %v396 = vsel %vm104, %v333, 0
    %v398 = vsel %vm104, %v335, 0
    %v400 = vsel %vm104, %v337, 0
    %v402 = vsel %vm104, %v339, 0
    %v404 = vsel %vm104, %v341, 0
    %v406 = vsel %vm104, %v343, 0
    %v408 = vsel %vm104, %v345, 0
    %v410 = vsel %vm104, %v347, 0
    %v412 = vsel %vm104, %v349, 0
    %v414 = vsel %vm104, %v351, 0
    %v416 = vsel %vm104, %v353, 0
    %v418 = vsel %vm104, %v355, 0
    %v420 = vsel %vm104, %v357, 0
    %v422 = vsel %vm104, %v359, 0
    %v424 = vsel %vm104, %v361, 0
    %426 = vmatprep.subr.mxu0 0.0
    %427 = vmatpush1.xpose.msra.mxu0 %v394
    %428 = vmatprep.subr.mxu0 0.0
    %429 = vmatpush1.xpose.msra.mxu0 %v396
    %430 = vmatprep.subr.mxu0 0.0
    %431 = vmatpush1.xpose.msra.mxu0 %v398
    %432 = vmatprep.subr.mxu0 0.0
    %433 = vmatpush1.xpose.msra.mxu0 %v400
    %434 = vmatprep.subr.mxu0 0.0
    %435 = vmatpush1.xpose.msra.mxu0 %v402
    %436 = vmatprep.subr.mxu0 0.0
    %437 = vmatpush1.xpose.msra.mxu0 %v404
    %438 = vmatprep.subr.mxu0 0.0
    %439 = vmatpush1.xpose.msra.mxu0 %v406
    %440 = vmatprep.subr.mxu0 0.0
    %441 = vmatpush1.xpose.msra.mxu0 %v408
    %442 = vmatprep.subr.mxu0 0.0
    %443 = vmatpush1.xpose.msra.mxu0 %v410
    %444 = vmatprep.subr.mxu0 0.0
    %445 = vmatpush1.xpose.msra.mxu0 %v412
    %446 = vmatprep.subr.mxu0 0.0
    %447 = vmatpush1.xpose.msra.mxu0 %v414
    %448 = vmatprep.subr.mxu0 0.0
    %449 = vmatpush1.xpose.msra.mxu0 %v416
    %450 = vmatprep.subr.mxu0 0.0
    %451 = vmatpush1.xpose.msra.mxu0 %v418
    %452 = vmatprep.subr.mxu0 0.0
    %453 = vmatpush1.xpose.msra.mxu0 %v420
    %454 = vmatprep.subr.mxu0 0.0
    %455 = vmatpush1.xpose.msra.mxu0 %v422
    %456 = vmatprep.subr.mxu0 0.0
    %457 = vmatpush1.xpose.msra.mxu0 %v424
    %458 = vmatprep.subr.mxu0 0.0
    %459 = vmatpush1.xpose.msra.mxu0 0.0
    %460 = vmatprep.subr.mxu0 0.0
    %461 = vmatpush1.xpose.msra.mxu0 0.0
    %462 = vmatprep.subr.mxu0 0.0
    %463 = vmatpush1.xpose.msra.mxu0 0.0
    %464 = vmatprep.subr.mxu0 0.0
    %465 = vmatpush1.xpose.msra.mxu0 0.0
    %466 = vmatprep.subr.mxu0 0.0
    %467 = vmatpush1.xpose.msra.mxu0 0.0
    %468 = vmatprep.subr.mxu0 0.0
    %469 = vmatpush1.xpose.msra.mxu0 0.0
    %470 = vmatprep.subr.mxu0 0.0
    %471 = vmatpush1.xpose.msra.mxu0 0.0
    %472 = vmatprep.subr.mxu0 0.0
    %473 = vmatpush1.xpose.msra.mxu0 0.0
    %474 = vmatprep.subr.mxu0 0.0
    %475 = vmatpush1.xpose.msra.mxu0 0.0
    %476 = vmatprep.subr.mxu0 0.0
    %477 = vmatpush1.xpose.msra.mxu0 0.0
    %478 = vmatprep.subr.mxu0 0.0
    %479 = vmatpush1.xpose.msra.mxu0 0.0
    %480 = vmatprep.subr.mxu0 0.0
    %481 = vmatpush1.xpose.msra.mxu0 0.0
    %482 = vmatprep.subr.mxu0 0.0
    %483 = vmatpush1.xpose.msra.mxu0 0.0
    %484 = vmatprep.subr.mxu0 0.0
    %485 = vmatpush1.xpose.msra.mxu0 0.0
    %486 = vmatprep.subr.mxu0 0.0
    %487 = vmatpush1.xpose.msra.mxu0 0.0
    %488 = vmatprep.subr.mxu0 0.0
    %489 = vmatpush1.xpose.msra.mxu0 0.0
    %490 = vmatprep.mubr.f32.mxu0 0.0
    %491 = vmatmul.mubr.f32.gmra.mrb[0].mxu0 %v362
    %v492 = vpop.f32.mrb[0].mxu0
    %v493 = vadd.f32 %v298, %v492
    %v494 = vpop.f32.mrb[0].mxu0
    %495 = vmatprep.mubr.f32.mxu0 0.0
    %496 = vmatmul.mubr.f32.gmra.mrb[0].mxu0 %v364
    %v497 = vpop.f32.mrb[0].mxu0
    %v498 = vadd.f32 %v299, %v497
    %v499 = vpop.f32.mrb[0].mxu0
    %500 = vmatprep.mubr.f32.mxu0 0.0
    %501 = vmatmul.mubr.f32.gmra.mrb[0].mxu0 %v366
    %v502 = vpop.f32.mrb[0].mxu0
    %v503 = vadd.f32 %v300, %v502
    %v504 = vpop.f32.mrb[0].mxu0
    %505 = vmatprep.mubr.f32.mxu0 0.0
    %506 = vmatmul.mubr.f32.gmra.mrb[0].mxu0 %v368
    %v507 = vpop.f32.mrb[0].mxu0
    %v508 = vadd.f32 %v301, %v507
    %v509 = vpop.f32.mrb[0].mxu0
    %510 = vmatprep.mubr.f32.mxu0 0.0
    %511 = vmatmul.mubr.f32.gmra.mrb[0].mxu0 %v370
    %v512 = vpop.f32.mrb[0].mxu0
    %v513 = vadd.f32 %v302, %v512
    %v514 = vpop.f32.mrb[0].mxu0
    %515 = vmatprep.mubr.f32.mxu0 0.0
    %516 = vmatmul.mubr.f32.gmra.mrb[0].mxu0 %v372
    %v517 = vpop.f32.mrb[0].mxu0
    %v518 = vadd.f32 %v303, %v517
    %v519 = vpop.f32.mrb[0].mxu0
    %520 = vmatprep.mubr.f32.mxu0 0.0
    %521 = vmatmul.mubr.f32.gmra.mrb[0].mxu0 %v374
    %v522 = vpop.f32.mrb[0].mxu0
    %v523 = vadd.f32 %v304, %v522
    %v524 = vpop.f32.mrb[0].mxu0
    %525 = vmatprep.mubr.f32.mxu0 0.0
    %526 = vmatmul.mubr.f32.gmra.mrb[0].mxu0 %v376
    %v527 = vpop.f32.mrb[0].mxu0
    %v528 = vadd.f32 %v305, %v527
    %v529 = vpop.f32.mrb[0].mxu0
    %530 = vmatprep.mubr.f32.mxu0 0.0
    %531 = vmatmul.mubr.f32.gmra.mrb[0].mxu0 %v378
    %v532 = vpop.f32.mrb[0].mxu0
    %v533 = vadd.f32 %v306, %v532
    %v534 = vpop.f32.mrb[0].mxu0
    %535 = vmatprep.mubr.f32.mxu0 0.0
    %536 = vmatmul.mubr.f32.gmra.mrb[0].mxu0 %v380
    %v537 = vpop.f32.mrb[0].mxu0
    %v538 = vadd.f32 %v307, %v537
    %v539 = vpop.f32.mrb[0].mxu0
    %540 = vmatprep.mubr.f32.mxu0 0.0
    %541 = vmatmul.mubr.f32.gmra.mrb[0].mxu0 %v382
    %v542 = vpop.f32.mrb[0].mxu0
    %v543 = vadd.f32 %v308, %v542
    %v544 = vpop.f32.mrb[0].mxu0
    %545 = vmatprep.mubr.f32.mxu0 0.0
    %546 = vmatmul.mubr.f32.gmra.mrb[0].mxu0 %v384
    %v547 = vpop.f32.mrb[0].mxu0
    %v548 = vadd.f32 %v309, %v547
    %v549 = vpop.f32.mrb[0].mxu0
    %550 = vmatprep.mubr.f32.mxu0 0.0
    %551 = vmatmul.mubr.f32.gmra.mrb[0].mxu0 %v386
    %v552 = vpop.f32.mrb[0].mxu0
    %v553 = vadd.f32 %v310, %v552
    %v554 = vpop.f32.mrb[0].mxu0
    %555 = vmatprep.mubr.f32.mxu0 0.0
    %556 = vmatmul.mubr.f32.gmra.mrb[0].mxu0 %v388
    %v557 = vpop.f32.mrb[0].mxu0
    %v558 = vadd.f32 %v311, %v557
    %v559 = vpop.f32.mrb[0].mxu0
    %560 = vmatprep.mubr.f32.mxu0 0.0
    %561 = vmatmul.mubr.f32.gmra.mrb[0].mxu0 %v390
    %v562 = vpop.f32.mrb[0].mxu0
    %v563 = vadd.f32 %v312, %v562
    %v564 = vpop.f32.mrb[0].mxu0
    %565 = vmatprep.mubr.f32.mxu0 0.0
    %566 = vmatmul.mubr.f32.gmra.mrb[0].mxu0 %v392
    %v567 = vpop.f32.mrb[0].mxu0
    %v568 = vadd.f32 %v313, %v567
    %v569 = vpop.f32.mrb[0].mxu0
    %570 = vdwg.mxu0
    %571 = vmax.xlane.f32.xlu0 %v493
    %v572 = vpop.xlane.xlu0 %571
    %573 = vmax.xlane.f32.xlu0 %v498
    %v574 = vpop.xlane.xlu0 %573
    %575 = vmax.xlane.f32.xlu0 %v503
    %v576 = vpop.xlane.xlu0 %575
    %577 = vmax.xlane.f32.xlu0 %v508
    %v578 = vpop.xlane.xlu0 %577
    %579 = vmax.xlane.f32.xlu0 %v513
    %v580 = vpop.xlane.xlu0 %579
    %581 = vmax.xlane.f32.xlu0 %v518
    %v582 = vpop.xlane.xlu0 %581
    %583 = vmax.xlane.f32.xlu0 %v523
    %v584 = vpop.xlane.xlu0 %583
    %585 = vmax.xlane.f32.xlu0 %v528
    %v586 = vpop.xlane.xlu0 %585
    %587 = vmax.xlane.f32.xlu0 %v533
    %v588 = vpop.xlane.xlu0 %587
    %589 = vmax.xlane.f32.xlu0 %v538
    %v590 = vpop.xlane.xlu0 %589
    %591 = vmax.xlane.f32.xlu0 %v543
    %v592 = vpop.xlane.xlu0 %591
    %593 = vmax.xlane.f32.xlu0 %v548
    %v594 = vpop.xlane.xlu0 %593
    %595 = vmax.xlane.f32.xlu0 %v553
    %v596 = vpop.xlane.xlu0 %595
    %597 = vmax.xlane.f32.xlu0 %v558
    %v598 = vpop.xlane.xlu0 %597
    %599 = vmax.xlane.f32.xlu0 %v563
    %v600 = vpop.xlane.xlu0 %599
    %601 = vmax.xlane.f32.xlu0 %v568
    %v602 = vpop.xlane.xlu0 %601
    %v603 = vsub.f32 %v493, %v572
    %v604 = vsub.f32 %v498, %v574
    %v605 = vsub.f32 %v503, %v576
    %v606 = vsub.f32 %v508, %v578
    %v607 = vsub.f32 %v513, %v580
    %v608 = vsub.f32 %v518, %v582
    %v609 = vsub.f32 %v523, %v584
    %v610 = vsub.f32 %v528, %v586
    %v611 = vsub.f32 %v533, %v588
    %v612 = vsub.f32 %v538, %v590
    %v613 = vsub.f32 %v543, %v592
    %v614 = vsub.f32 %v548, %v594
    %v615 = vsub.f32 %v553, %v596
    %v616 = vsub.f32 %v558, %v598
    %v617 = vsub.f32 %v563, %v600
    %v618 = vsub.f32 %v568, %v602
    %v619 = vmul.f32 %v603, 1.442695
    %v620 = vpow.pop %v619
    %v621 = vmul.f32 %v604, 1.442695
    %v622 = vpow.pop %v621
    %v623 = vmul.f32 %v605, 1.442695
    %v624 = vpow.pop %v623
    %v625 = vmul.f32 %v606, 1.442695
    %v626 = vpow.pop %v625
    %v627 = vmul.f32 %v607, 1.442695
    %v628 = vpow.pop %v627
    %v629 = vmul.f32 %v608, 1.442695
    %v630 = vpow.pop %v629
    %v631 = vmul.f32 %v609, 1.442695
    %v632 = vpow.pop %v631
    %v633 = vmul.f32 %v610, 1.442695
    %v634 = vpow.pop %v633
    %v635 = vmul.f32 %v611, 1.442695
    %v636 = vpow.pop %v635
    %v637 = vmul.f32 %v612, 1.442695
    %v638 = vpow.pop %v637
    %v639 = vmul.f32 %v613, 1.442695
    %v640 = vpow.pop %v639
    %v641 = vmul.f32 %v614, 1.442695
    %v642 = vpow.pop %v641
    %v643 = vmul.f32 %v615, 1.442695
    %v644 = vpow.pop %v643
    %v645 = vmul.f32 %v616, 1.442695
    %v646 = vpow.pop %v645
    %v647 = vmul.f32 %v617, 1.442695
    %v648 = vpow.pop %v647
    %v649 = vmul.f32 %v618, 1.442695
    %v650 = vpow.pop %v649
    %651 = vadd.xlane.f32.xlu0 %v620
    %v652 = vpop.xlane.xlu0 %651
    %653 = vadd.xlane.f32.xlu0 %v622
    %v654 = vpop.xlane.xlu0 %653
    %655 = vadd.xlane.f32.xlu0 %v624
    %v656 = vpop.xlane.xlu0 %655
    %657 = vadd.xlane.f32.xlu0 %v626
    %v658 = vpop.xlane.xlu0 %657
    %659 = vadd.xlane.f32.xlu0 %v628
    %v660 = vpop.xlane.xlu0 %659
    %661 = vadd.xlane.f32.xlu0 %v630
    %v662 = vpop.xlane.xlu0 %661
    %663 = vadd.xlane.f32.xlu0 %v632
    %v664 = vpop.xlane.xlu0 %663
    %665 = vadd.xlane.f32.xlu0 %v634
    %v666 = vpop.xlane.xlu0 %665
    %667 = vadd.xlane.f32.xlu0 %v636
    %v668 = vpop.xlane.xlu0 %667
    %669 = vadd.xlane.f32.xlu0 %v638
    %v670 = vpop.xlane.xlu0 %669
    %671 = vadd.xlane.f32.xlu0 %v640
    %v672 = vpop.xlane.xlu0 %671
    %673 = vadd.xlane.f32.xlu0 %v642
    %v674 = vpop.xlane.xlu0 %673
    %675 = vadd.xlane.f32.xlu0 %v644
    %v676 = vpop.xlane.xlu0 %675
    %677 = vadd.xlane.f32.xlu0 %v646
    %v678 = vpop.xlane.xlu0 %677
    %679 = vadd.xlane.f32.xlu0 %v648
    %v680 = vpop.xlane.xlu0 %679
    %681 = vadd.xlane.f32.xlu0 %v650
    %v682 = vpop.xlane.xlu0 %681
    %v683 = vrcp.pop %v652
    %v684 = vrcp.pop %v654
    %v685 = vrcp.pop %v656
    %v686 = vrcp.pop %v658
    %v687 = vrcp.pop %v660
    %v688 = vrcp.pop %v662
    %v689 = vrcp.pop %v664
    %v690 = vrcp.pop %v666
    %v691 = vrcp.pop %v668
    %v692 = vrcp.pop %v670
    %v693 = vrcp.pop %v672
    %v694 = vrcp.pop %v674
    %v695 = vrcp.pop %v676
    %v696 = vrcp.pop %v678
    %v697 = vrcp.pop %v680
    %v698 = vrcp.pop %v682
    %v699 = vmul.f32 %v620, %v683
    %v700 = vmul.f32 %v622, %v684
    %v701 = vmul.f32 %v624, %v685
    %v702 = vmul.f32 %v626, %v686
    %v703 = vmul.f32 %v628, %v687
    %v704 = vmul.f32 %v630, %v688
    %v705 = vmul.f32 %v632, %v689
    %v706 = vmul.f32 %v634, %v690
    %v707 = vmul.f32 %v636, %v691
    %v708 = vmul.f32 %v638, %v692
    %v709 = vmul.f32 %v640, %v693
    %v710 = vmul.f32 %v642, %v694
    %v711 = vmul.f32 %v644, %v695
    %v712 = vmul.f32 %v646, %v696
    %v713 = vmul.f32 %v648, %v697
    %v714 = vmul.f32 %v650, %v698
    %715 = vst [vmem:[#allocation3] sm:$0xff] %v699
    %716 = vst [vmem:[#allocation3 + $0x8] sm:$0xff] %v700
    %717 = vst [vmem:[#allocation3 + $0x10] sm:$0xff] %v701
    %718 = vst [vmem:[#allocation3 + $0x18] sm:$0xff] %v702
    %719 = vst [vmem:[#allocation3 + $0x20] sm:$0xff] %v703
    %720 = vst [vmem:[#allocation3 + $0x28] sm:$0xff] %v704
    %721 = vst [vmem:[#allocation3 + $0x30] sm:$0xff] %v705
    %722 = vst [vmem:[#allocation3 + $0x38] sm:$0xff] %v706
    %723 = vst [vmem:[#allocation3 + $0x40] sm:$0xff] %v707
    %724 = vst [vmem:[#allocation3 + $0x48] sm:$0xff] %v708
    %725 = vst [vmem:[#allocation3 + $0x50] sm:$0xff] %v709
    %726 = vst [vmem:[#allocation3 + $0x58] sm:$0xff] %v710
    %727 = vst [vmem:[#allocation3 + $0x60] sm:$0xff] %v711
    %728 = vst [vmem:[#allocation3 + $0x68] sm:$0xff] %v712
    %729 = vst [vmem:[#allocation3 + $0x70] sm:$0xff] %v713
    %730 = vst [vmem:[#allocation3 + $0x78] sm:$0xff] %v714
    %731 = vrot.lane.b32.xlu0 %v220, 64
    %v732 = vpop.permute.xlu0 %731
    %733 = vrot.lane.b32.xlu0 %v225, 64
    %v734 = vpop.permute.xlu0 %733
    %735 = vrot.lane.b32.xlu0 %v230, 64
    %v736 = vpop.permute.xlu0 %735
    %737 = vrot.lane.b32.xlu0 %v235, 64
    %v738 = vpop.permute.xlu0 %737
    %739 = vrot.lane.b32.xlu0 %v240, 64
    %v740 = vpop.permute.xlu0 %739
    %741 = vrot.lane.b32.xlu0 %v245, 64
    %v742 = vpop.permute.xlu0 %741
    %743 = vrot.lane.b32.xlu0 %v250, 64
    %v744 = vpop.permute.xlu0 %743
    %745 = vrot.lane.b32.xlu0 %v255, 64
    %v746 = vpop.permute.xlu0 %745
    %747 = vrot.lane.b32.xlu0 %v260, 64
    %v748 = vpop.permute.xlu0 %747
    %749 = vrot.lane.b32.xlu0 %v265, 64
    %v750 = vpop.permute.xlu0 %749
    %751 = vrot.lane.b32.xlu0 %v270, 64
    %v752 = vpop.permute.xlu0 %751
    %753 = vrot.lane.b32.xlu0 %v275, 64
    %v754 = vpop.permute.xlu0 %753
    %755 = vrot.lane.b32.xlu0 %v280, 64
    %v756 = vpop.permute.xlu0 %755
    %757 = vrot.lane.b32.xlu0 %v285, 64
    %v758 = vpop.permute.xlu0 %757
    %759 = vrot.lane.b32.xlu0 %v290, 64
    %v760 = vpop.permute.xlu0 %759
    %761 = vrot.lane.b32.xlu0 %v295, 64
    %v762 = vpop.permute.xlu0 %761
    %779 = vmatprep.subr.mxu0 0.0
    %780 = vmatpush1.msra.mxu0 %v732
    %781 = vmatprep.subr.mxu0 0.0
    %782 = vmatpush1.msra.mxu0 %v734
    %783 = vmatprep.subr.mxu0 0.0
    %784 = vmatpush1.msra.mxu0 %v736
    %785 = vmatprep.subr.mxu0 0.0
    %786 = vmatpush1.msra.mxu0 %v738
    %787 = vmatprep.subr.mxu0 0.0
    %788 = vmatpush1.msra.mxu0 %v740
    %789 = vmatprep.subr.mxu0 0.0
    %790 = vmatpush1.msra.mxu0 %v742
    %791 = vmatprep.subr.mxu0 0.0
    %792 = vmatpush1.msra.mxu0 %v744
    %793 = vmatprep.subr.mxu0 0.0
    %794 = vmatpush1.msra.mxu0 %v746
    %795 = vmatprep.subr.mxu0 0.0
    %796 = vmatpush1.msra.mxu0 %v748
    %797 = vmatprep.subr.mxu0 0.0
    %798 = vmatpush1.msra.mxu0 %v750
    %799 = vmatprep.subr.mxu0 0.0
    %800 = vmatpush1.msra.mxu0 %v752
    %801 = vmatprep.subr.mxu0 0.0
    %802 = vmatpush1.msra.mxu0 %v754
    %803 = vmatprep.subr.mxu0 0.0
    %804 = vmatpush1.msra.mxu0 %v756
    %805 = vmatprep.subr.mxu0 0.0
    %806 = vmatpush1.msra.mxu0 %v758
    %807 = vmatprep.subr.mxu0 0.0
    %808 = vmatpush1.msra.mxu0 %v760
    %809 = vmatprep.subr.mxu0 0.0
    %810 = vmatpush1.msra.mxu0 %v762
    %811 = vmatprep.subr.mxu0 0.0
    %812 = vmatpush1.msra.mxu0 0.0
    %813 = vmatprep.subr.mxu0 0.0
    %814 = vmatpush1.msra.mxu0 0.0
    %815 = vmatprep.subr.mxu0 0.0
    %816 = vmatpush1.msra.mxu0 0.0
    %817 = vmatprep.subr.mxu0 0.0
    %818 = vmatpush1.msra.mxu0 0.0
    %819 = vmatprep.subr.mxu0 0.0
    %820 = vmatpush1.msra.mxu0 0.0
    %821 = vmatprep.subr.mxu0 0.0
    %822 = vmatpush1.msra.mxu0 0.0
    %823 = vmatprep.subr.mxu0 0.0
    %824 = vmatpush1.msra.mxu0 0.0
    %825 = vmatprep.subr.mxu0 0.0
    %826 = vmatpush1.msra.mxu0 0.0
    %827 = vmatprep.subr.mxu0 0.0
    %828 = vmatpush1.msra.mxu0 0.0
    %829 = vmatprep.subr.mxu0 0.0
    %830 = vmatpush1.msra.mxu0 0.0
    %831 = vmatprep.subr.mxu0 0.0
    %832 = vmatpush1.msra.mxu0 0.0
    %833 = vmatprep.subr.mxu0 0.0
    %834 = vmatpush1.msra.mxu0 0.0
    %835 = vmatprep.subr.mxu0 0.0
    %836 = vmatpush1.msra.mxu0 0.0
    %837 = vmatprep.subr.mxu0 0.0
    %838 = vmatpush1.msra.mxu0 0.0
    %839 = vmatprep.subr.mxu0 0.0
    %840 = vmatpush1.msra.mxu0 0.0
    %841 = vmatprep.subr.mxu0 0.0
    %842 = vmatpush1.msra.mxu0 0.0
    %843 = vmatprep.mubr.f32.mxu0 0.0
    %844 = vmatmul.mubr.f32.gmra.mrb[0].mxu0 %v699
    %v845 = vpop.f32.mrb[0].mxu0
    %v846 = vadd.f32 0.0, %v845
    %v847 = vpop.f32.mrb[0].mxu0
    %848 = vmatprep.mubr.f32.mxu0 0.0
    %849 = vmatmul.mubr.f32.gmra.mrb[0].mxu0 %v700
    %v850 = vpop.f32.mrb[0].mxu0
    %v851 = vadd.f32 0.0, %v850
    %v852 = vpop.f32.mrb[0].mxu0
    %853 = vmatprep.mubr.f32.mxu0 0.0
    %854 = vmatmul.mubr.f32.gmra.mrb[0].mxu0 %v701
    %v855 = vpop.f32.mrb[0].mxu0
    %v856 = vadd.f32 0.0, %v855
    %v857 = vpop.f32.mrb[0].mxu0
    %858 = vmatprep.mubr.f32.mxu0 0.0
    %859 = vmatmul.mubr.f32.gmra.mrb[0].mxu0 %v702
    %v860 = vpop.f32.mrb[0].mxu0
    %v861 = vadd.f32 0.0, %v860
    %v862 = vpop.f32.mrb[0].mxu0
    %863 = vmatprep.mubr.f32.mxu0 0.0
    %864 = vmatmul.mubr.f32.gmra.mrb[0].mxu0 %v703
    %v865 = vpop.f32.mrb[0].mxu0
    %v866 = vadd.f32 0.0, %v865
    %v867 = vpop.f32.mrb[0].mxu0
    %868 = vmatprep.mubr.f32.mxu0 0.0
    %869 = vmatmul.mubr.f32.gmra.mrb[0].mxu0 %v704
    %v870 = vpop.f32.mrb[0].mxu0
    %v871 = vadd.f32 0.0, %v870
    %v872 = vpop.f32.mrb[0].mxu0
    %873 = vmatprep.mubr.f32.mxu0 0.0
    %874 = vmatmul.mubr.f32.gmra.mrb[0].mxu0 %v705
    %v875 = vpop.f32.mrb[0].mxu0
    %v876 = vadd.f32 0.0, %v875
    %v877 = vpop.f32.mrb[0].mxu0
    %878 = vmatprep.mubr.f32.mxu0 0.0
    %879 = vmatmul.mubr.f32.gmra.mrb[0].mxu0 %v706
    %v880 = vpop.f32.mrb[0].mxu0
    %v881 = vadd.f32 0.0, %v880
    %v882 = vpop.f32.mrb[0].mxu0
    %883 = vmatprep.mubr.f32.mxu0 0.0
    %884 = vmatmul.mubr.f32.gmra.mrb[0].mxu0 %v707
    %v885 = vpop.f32.mrb[0].mxu0
    %v886 = vadd.f32 0.0, %v885
    %v887 = vpop.f32.mrb[0].mxu0
    %888 = vmatprep.mubr.f32.mxu0 0.0
    %889 = vmatmul.mubr.f32.gmra.mrb[0].mxu0 %v708
    %v890 = vpop.f32.mrb[0].mxu0
    %v891 = vadd.f32 0.0, %v890
    %v892 = vpop.f32.mrb[0].mxu0
    %893 = vmatprep.mubr.f32.mxu0 0.0
    %894 = vmatmul.mubr.f32.gmra.mrb[0].mxu0 %v709
    %v895 = vpop.f32.mrb[0].mxu0
    %v896 = vadd.f32 0.0, %v895
    %v897 = vpop.f32.mrb[0].mxu0
    %898 = vmatprep.mubr.f32.mxu0 0.0
    %899 = vmatmul.mubr.f32.gmra.mrb[0].mxu0 %v710
    %v900 = vpop.f32.mrb[0].mxu0
    %v901 = vadd.f32 0.0, %v900
    %v902 = vpop.f32.mrb[0].mxu0
    %903 = vmatprep.mubr.f32.mxu0 0.0
    %904 = vmatmul.mubr.f32.gmra.mrb[0].mxu0 %v711
    %v905 = vpop.f32.mrb[0].mxu0
    %v906 = vadd.f32 0.0, %v905
    %v907 = vpop.f32.mrb[0].mxu0
    %908 = vmatprep.mubr.f32.mxu0 0.0
    %909 = vmatmul.mubr.f32.gmra.mrb[0].mxu0 %v712
    %v910 = vpop.f32.mrb[0].mxu0
    %v911 = vadd.f32 0.0, %v910
    %v912 = vpop.f32.mrb[0].mxu0
    %913 = vmatprep.mubr.f32.mxu0 0.0
    %914 = vmatmul.mubr.f32.gmra.mrb[0].mxu0 %v713
    %v915 = vpop.f32.mrb[0].mxu0
    %v916 = vadd.f32 0.0, %v915
    %v917 = vpop.f32.mrb[0].mxu0
    %918 = vmatprep.mubr.f32.mxu0 0.0
    %919 = vmatmul.mubr.f32.gmra.mrb[0].mxu0 %v714
    %v920 = vpop.f32.mrb[0].mxu0
    %v921 = vadd.f32 0.0, %v920
    %v922 = vpop.f32.mrb[0].mxu0
    %923 = vdwg.mxu0
    %s924 = sld [smem:[#allocation2]]
    %v925 = vstv %s924
    %v926 = vmul.f32 %v925, %v846
    %v927 = vmul.f32 %v925, %v851
    %v928 = vmul.f32 %v925, %v856
    %v929 = vmul.f32 %v925, %v861
    %v930 = vmul.f32 %v925, %v866
    %v931 = vmul.f32 %v925, %v871
    %v932 = vmul.f32 %v925, %v876
    %v933 = vmul.f32 %v925, %v881
    %v934 = vmul.f32 %v925, %v886
    %v935 = vmul.f32 %v925, %v891
    %v936 = vmul.f32 %v925, %v896
    %v937 = vmul.f32 %v925, %v901
    %v938 = vmul.f32 %v925, %v906
    %v939 = vmul.f32 %v925, %v911
    %v940 = vmul.f32 %v925, %v916
    %v941 = vmul.f32 %v925, %v921
    %v942 = vadd.f32 %v926, %v77
    %v943 = vadd.f32 %v927, %v78
    %v944 = vadd.f32 %v928, %v79
    %v945 = vadd.f32 %v929, %v80
    %v946 = vadd.f32 %v930, %v81
    %v947 = vadd.f32 %v931, %v82
    %v948 = vadd.f32 %v932, %v83
    %v949 = vadd.f32 %v933, %v84
    %v950 = vadd.f32 %v934, %v85
    %v951 = vadd.f32 %v935, %v86
    %v952 = vadd.f32 %v936, %v87
    %v953 = vadd.f32 %v937, %v88
    %v954 = vadd.f32 %v938, %v89
    %v955 = vadd.f32 %v939, %v90
    %v956 = vadd.f32 %v940, %v91
    %v957 = vadd.f32 %v941, %v92
    %v958 = vld [vmem:[%s6] sm:$0xff]
    %v959 = vld [vmem:[%s6 + $0x8] sm:$0xff]
    %v960 = vld [vmem:[%s6 + $0x10] sm:$0xff]
    %v961 = vld [vmem:[%s6 + $0x18] sm:$0xff]
    %v962 = vld [vmem:[%s7] sm:$0x1]
    %v964 = vlaneseq
    %v965 = vshrl.u32 %v964, 7
    %v966 = vsub.s32 0, %v965
    %v967 = vrot.slane %v962, %v966
    %v970 = vsel %vm104, %v942, 0
    %v973 = vsel %vm104, %v943, 0
    %v976 = vsel %vm104, %v944, 0
    %v979 = vsel %vm104, %v945, 0
    %v982 = vsel %vm104, %v946, 0
    %v985 = vsel %vm104, %v947, 0
    %v988 = vsel %vm104, %v948, 0
    %v991 = vsel %vm104, %v949, 0
    %v994 = vsel %vm104, %v950, 0
    %v997 = vsel %vm104, %v951, 0
    %v1000 = vsel %vm104, %v952, 0
    %v1003 = vsel %vm104, %v953, 0
    %v1006 = vsel %vm104, %v954, 0
    %v1009 = vsel %vm104, %v955, 0
    %v1012 = vsel %vm104, %v956, 0
    %v1015 = vsel %vm104, %v957, 0
    %1017 = vmatprep.subr.mxu0 0.0
    %1018 = vmatpush1.msra.mxu0 %v958
    %1019 = vmatprep.subr.mxu0 0.0
    %1020 = vmatpush1.msra.mxu0 %v959
    %1021 = vmatprep.subr.mxu0 0.0
    %1022 = vmatpush1.msra.mxu0 %v960
    %1023 = vmatprep.subr.mxu0 0.0
    %1024 = vmatpush1.msra.mxu0 %v961
    %1025 = vmatprep.subr.mxu0 0.0
    %1026 = vmatpush1.msra.mxu0 0.0
    %1027 = vmatprep.subr.mxu0 0.0
    %1028 = vmatpush1.msra.mxu0 0.0
    %1029 = vmatprep.subr.mxu0 0.0
    %1030 = vmatpush1.msra.mxu0 0.0
    %1031 = vmatprep.subr.mxu0 0.0
    %1032 = vmatpush1.msra.mxu0 0.0
    %1033 = vmatprep.subr.mxu0 0.0
    %1034 = vmatpush1.msra.mxu0 0.0
    %1035 = vmatprep.subr.mxu0 0.0
    %1036 = vmatpush1.msra.mxu0 0.0
    %1037 = vmatprep.subr.mxu0 0.0
    %1038 = vmatpush1.msra.mxu0 0.0
    %1039 = vmatprep.subr.mxu0 0.0
    %1040 = vmatpush1.msra.mxu0 0.0
    %1041 = vmatprep.subr.mxu0 0.0
    %1042 = vmatpush1.msra.mxu0 0.0
    %1043 = vmatprep.subr.mxu0 0.0
    %1044 = vmatpush1.msra.mxu0 0.0
    %1045 = vmatprep.subr.mxu0 0.0
    %1046 = vmatpush1.msra.mxu0 0.0
    %1047 = vmatprep.subr.mxu0 0.0
    %1048 = vmatpush1.msra.mxu0 0.0
    %1049 = vmatprep.subr.mxu0 0.0
    %1050 = vmatpush1.msra.mxu0 0.0
    %1051 = vmatprep.subr.mxu0 0.0
    %1052 = vmatpush1.msra.mxu0 0.0
    %1053 = vmatprep.subr.mxu0 0.0
    %1054 = vmatpush1.msra.mxu0 0.0
    %1055 = vmatprep.subr.mxu0 0.0
    %1056 = vmatpush1.msra.mxu0 0.0
    %1057 = vmatprep.subr.mxu0 0.0
    %1058 = vmatpush1.msra.mxu0 0.0
    %1059 = vmatprep.subr.mxu0 0.0
    %1060 = vmatpush1.msra.mxu0 0.0
    %1061 = vmatprep.subr.mxu0 0.0
    %1062 = vmatpush1.msra.mxu0 0.0
    %1063 = vmatprep.subr.mxu0 0.0
    %1064 = vmatpush1.msra.mxu0 0.0
    %1065 = vmatprep.subr.mxu0 0.0
    %1066 = vmatpush1.msra.mxu0 0.0
    %1067 = vmatprep.subr.mxu0 0.0
    %1068 = vmatpush1.msra.mxu0 0.0
    %1069 = vmatprep.subr.mxu0 0.0
    %1070 = vmatpush1.msra.mxu0 0.0
    %1071 = vmatprep.subr.mxu0 0.0
    %1072 = vmatpush1.msra.mxu0 0.0
    %1073 = vmatprep.subr.mxu0 0.0
    %1074 = vmatpush1.msra.mxu0 0.0
    %1075 = vmatprep.subr.mxu0 0.0
    %1076 = vmatpush1.msra.mxu0 0.0
    %1077 = vmatprep.subr.mxu0 0.0
    %1078 = vmatpush1.msra.mxu0 0.0
    %1079 = vmatprep.subr.mxu0 0.0
    %1080 = vmatpush1.msra.mxu0 0.0
    %1081 = vmatprep.mubr.f32.mxu0 0.0
    %1082 = vmatmul.mubr.f32.gmra.mrb[0].mxu0 %v970
    %v1083 = vpop.f32.mrb[0].mxu0
    %v1084 = vadd.f32 %v967, %v1083
    %v1085 = vpop.f32.mrb[0].mxu0
    %1086 = vmatprep.mubr.f32.mxu0 0.0
    %1087 = vmatmul.mubr.f32.gmra.mrb[0].mxu0 %v973
    %v1088 = vpop.f32.mrb[0].mxu0
    %v1089 = vadd.f32 %v967, %v1088
    %v1090 = vpop.f32.mrb[0].mxu0
    %1091 = vmatprep.mubr.f32.mxu0 0.0
    %1092 = vmatmul.mubr.f32.gmra.mrb[0].mxu0 %v976
    %v1093 = vpop.f32.mrb[0].mxu0
    %v1094 = vadd.f32 %v967, %v1093
    %v1095 = vpop.f32.mrb[0].mxu0
    %1096 = vmatprep.mubr.f32.mxu0 0.0
    %1097 = vmatmul.mubr.f32.gmra.mrb[0].mxu0 %v979
    %v1098 = vpop.f32.mrb[0].mxu0
    %v1099 = vadd.f32 %v967, %v1098
    %v1100 = vpop.f32.mrb[0].mxu0
    %1101 = vmatprep.mubr.f32.mxu0 0.0
    %1102 = vmatmul.mubr.f32.gmra.mrb[0].mxu0 %v982
    %v1103 = vpop.f32.mrb[0].mxu0
    %v1104 = vadd.f32 %v967, %v1103
    %v1105 = vpop.f32.mrb[0].mxu0
    %1106 = vmatprep.mubr.f32.mxu0 0.0
    %1107 = vmatmul.mubr.f32.gmra.mrb[0].mxu0 %v985
    %v1108 = vpop.f32.mrb[0].mxu0
    %v1109 = vadd.f32 %v967, %v1108
    %v1110 = vpop.f32.mrb[0].mxu0
    %1111 = vmatprep.mubr.f32.mxu0 0.0
    %1112 = vmatmul.mubr.f32.gmra.mrb[0].mxu0 %v988
    %v1113 = vpop.f32.mrb[0].mxu0
    %v1114 = vadd.f32 %v967, %v1113
    %v1115 = vpop.f32.mrb[0].mxu0
    %1116 = vmatprep.mubr.f32.mxu0 0.0
    %1117 = vmatmul.mubr.f32.gmra.mrb[0].mxu0 %v991
    %v1118 = vpop.f32.mrb[0].mxu0
    %v1119 = vadd.f32 %v967, %v1118
    %v1120 = vpop.f32.mrb[0].mxu0
    %1121 = vmatprep.mubr.f32.mxu0 0.0
    %1122 = vmatmul.mubr.f32.gmra.mrb[0].mxu0 %v994
    %v1123 = vpop.f32.mrb[0].mxu0
    %v1124 = vadd.f32 %v967, %v1123
    %v1125 = vpop.f32.mrb[0].mxu0
    %1126 = vmatprep.mubr.f32.mxu0 0.0
    %1127 = vmatmul.mubr.f32.gmra.mrb[0].mxu0 %v997
    %v1128 = vpop.f32.mrb[0].mxu0
    %v1129 = vadd.f32 %v967, %v1128
    %v1130 = vpop.f32.mrb[0].mxu0
    %1131 = vmatprep.mubr.f32.mxu0 0.0
    %1132 = vmatmul.mubr.f32.gmra.mrb[0].mxu0 %v1000
    %v1133 = vpop.f32.mrb[0].mxu0
    %v1134 = vadd.f32 %v967, %v1133
    %v1135 = vpop.f32.mrb[0].mxu0
    %1136 = vmatprep.mubr.f32.mxu0 0.0
    %1137 = vmatmul.mubr.f32.gmra.mrb[0].mxu0 %v1003
    %v1138 = vpop.f32.mrb[0].mxu0
    %v1139 = vadd.f32 %v967, %v1138
    %v1140 = vpop.f32.mrb[0].mxu0
    %1141 = vmatprep.mubr.f32.mxu0 0.0
    %1142 = vmatmul.mubr.f32.gmra.mrb[0].mxu0 %v1006
    %v1143 = vpop.f32.mrb[0].mxu0
    %v1144 = vadd.f32 %v967, %v1143
    %v1145 = vpop.f32.mrb[0].mxu0
    %1146 = vmatprep.mubr.f32.mxu0 0.0
    %1147 = vmatmul.mubr.f32.gmra.mrb[0].mxu0 %v1009
    %v1148 = vpop.f32.mrb[0].mxu0
    %v1149 = vadd.f32 %v967, %v1148
    %v1150 = vpop.f32.mrb[0].mxu0
    %1151 = vmatprep.mubr.f32.mxu0 0.0
    %1152 = vmatmul.mubr.f32.gmra.mrb[0].mxu0 %v1012
    %v1153 = vpop.f32.mrb[0].mxu0
    %v1154 = vadd.f32 %v967, %v1153
    %v1155 = vpop.f32.mrb[0].mxu0
    %1156 = vmatprep.mubr.f32.mxu0 0.0
    %1157 = vmatmul.mubr.f32.gmra.mrb[0].mxu0 %v1015
    %v1158 = vpop.f32.mrb[0].mxu0
    %v1159 = vadd.f32 %v967, %v1158
    %v1160 = vpop.f32.mrb[0].mxu0
    %1161 = vdwg.mxu0
    %v1162 = vmax.f32 %v1084, 0.0
    %v1163 = vmax.f32 %v1089, 0.0
    %v1164 = vmax.f32 %v1094, 0.0
    %v1165 = vmax.f32 %v1099, 0.0
    %v1166 = vmax.f32 %v1104, 0.0
    %v1167 = vmax.f32 %v1109, 0.0
    %v1168 = vmax.f32 %v1114, 0.0
    %v1169 = vmax.f32 %v1119, 0.0
    %v1170 = vmax.f32 %v1124, 0.0
    %v1171 = vmax.f32 %v1129, 0.0
    %v1172 = vmax.f32 %v1134, 0.0
    %v1173 = vmax.f32 %v1139, 0.0
    %v1174 = vmax.f32 %v1144, 0.0
    %v1175 = vmax.f32 %v1149, 0.0
    %v1176 = vmax.f32 %v1154, 0.0
    %v1177 = vmax.f32 %v1159, 0.0
    %v1178 = vld [vmem:[%s8] sm:$0xff]
    %v1179 = vld [vmem:[%s8 + $0x8] sm:$0xff]
    %v1180 = vld [vmem:[%s9] sm:$0x1]
    %v1182 = vlaneseq
    %v1183 = vshrl.u32 %v1182, 7
    %v1184 = vsub.s32 0, %v1183
    %v1185 = vrot.slane %v1180, %v1184
    %vm1187 = vcmask 130048
    %v1189 = vsel %vm1187, %v1162, 0
    %v1192 = vsel %vm1187, %v1163, 0
    %v1195 = vsel %vm1187, %v1164, 0
    %v1198 = vsel %vm1187, %v1165, 0
    %v1201 = vsel %vm1187, %v1166, 0
    %v1204 = vsel %vm1187, %v1167, 0
    %v1207 = vsel %vm1187, %v1168, 0
    %v1210 = vsel %vm1187, %v1169, 0
    %v1213 = vsel %vm1187, %v1170, 0
    %v1216 = vsel %vm1187, %v1171, 0
    %v1219 = vsel %vm1187, %v1172, 0
    %v1222 = vsel %vm1187, %v1173, 0
    %v1225 = vsel %vm1187, %v1174, 0
    %v1228 = vsel %vm1187, %v1175, 0
    %v1231 = vsel %vm1187, %v1176, 0
    %v1234 = vsel %vm1187, %v1177, 0
    %1236 = vmatprep.subr.mxu0 0.0
    %1237 = vmatpush1.msra.mxu0 %v1178
    %1238 = vmatprep.subr.mxu0 0.0
    %1239 = vmatpush1.msra.mxu0 %v1179
    %1240 = vmatprep.subr.mxu0 0.0
    %1241 = vmatpush1.msra.mxu0 0.0
    %1242 = vmatprep.subr.mxu0 0.0
    %1243 = vmatpush1.msra.mxu0 0.0
    %1244 = vmatprep.subr.mxu0 0.0
    %1245 = vmatpush1.msra.mxu0 0.0
    %1246 = vmatprep.subr.mxu0 0.0
    %1247 = vmatpush1.msra.mxu0 0.0
    %1248 = vmatprep.subr.mxu0 0.0
    %1249 = vmatpush1.msra.mxu0 0.0
    %1250 = vmatprep.subr.mxu0 0.0
    %1251 = vmatpush1.msra.mxu0 0.0
    %1252 = vmatprep.subr.mxu0 0.0
    %1253 = vmatpush1.msra.mxu0 0.0
    %1254 = vmatprep.subr.mxu0 0.0
    %1255 = vmatpush1.msra.mxu0 0.0
    %1256 = vmatprep.subr.mxu0 0.0
    %1257 = vmatpush1.msra.mxu0 0.0
    %1258 = vmatprep.subr.mxu0 0.0
    %1259 = vmatpush1.msra.mxu0 0.0
    %1260 = vmatprep.subr.mxu0 0.0
    %1261 = vmatpush1.msra.mxu0 0.0
    %1262 = vmatprep.subr.mxu0 0.0
    %1263 = vmatpush1.msra.mxu0 0.0
    %1264 = vmatprep.subr.mxu0 0.0
    %1265 = vmatpush1.msra.mxu0 0.0
    %1266 = vmatprep.subr.mxu0 0.0
    %1267 = vmatpush1.msra.mxu0 0.0
    %1268 = vmatprep.subr.mxu0 0.0
    %1269 = vmatpush1.msra.mxu0 0.0
    %1270 = vmatprep.subr.mxu0 0.0
    %1271 = vmatpush1.msra.mxu0 0.0
    %1272 = vmatprep.subr.mxu0 0.0
    %1273 = vmatpush1.msra.mxu0 0.0
    %1274 = vmatprep.subr.mxu0 0.0
    %1275 = vmatpush1.msra.mxu0 0.0
    %1276 = vmatprep.subr.mxu0 0.0
    %1277 = vmatpush1.msra.mxu0 0.0
    %1278 = vmatprep.subr.mxu0 0.0
    %1279 = vmatpush1.msra.mxu0 0.0
    %1280 = vmatprep.subr.mxu0 0.0
    %1281 = vmatpush1.msra.mxu0 0.0
    %1282 = vmatprep.subr.mxu0 0.0
    %1283 = vmatpush1.msra.mxu0 0.0
    %1284 = vmatprep.subr.mxu0 0.0
    %1285 = vmatpush1.msra.mxu0 0.0
    %1286 = vmatprep.subr.mxu0 0.0
    %1287 = vmatpush1.msra.mxu0 0.0
    %1288 = vmatprep.subr.mxu0 0.0
    %1289 = vmatpush1.msra.mxu0 0.0
    %1290 = vmatprep.subr.mxu0 0.0
    %1291 = vmatpush1.msra.mxu0 0.0
    %1292 = vmatprep.subr.mxu0 0.0
    %1293 = vmatpush1.msra.mxu0 0.0
    %1294 = vmatprep.subr.mxu0 0.0
    %1295 = vmatpush1.msra.mxu0 0.0
    %1296 = vmatprep.subr.mxu0 0.0
    %1297 = vmatpush1.msra.mxu0 0.0
    %1298 = vmatprep.subr.mxu0 0.0
    %1299 = vmatpush1.msra.mxu0 0.0
    %1300 = vmatprep.mubr.f32.mxu0 0.0
    %1301 = vmatmul.mubr.f32.gmra.mrb[0].mxu0 %v1189
    %v1302 = vpop.f32.mrb[0].mxu0
    %v1303 = vadd.f32 %v1185, %v1302
    %v1304 = vpop.f32.mrb[0].mxu0
    %1305 = vmatprep.mubr.f32.mxu0 0.0
    %1306 = vmatmul.mubr.f32.gmra.mrb[0].mxu0 %v1192
    %v1307 = vpop.f32.mrb[0].mxu0
    %v1308 = vadd.f32 %v1185, %v1307
    %v1309 = vpop.f32.mrb[0].mxu0
    %1310 = vmatprep.mubr.f32.mxu0 0.0
    %1311 = vmatmul.mubr.f32.gmra.mrb[0].mxu0 %v1195
    %v1312 = vpop.f32.mrb[0].mxu0
    %v1313 = vadd.f32 %v1185, %v1312
    %v1314 = vpop.f32.mrb[0].mxu0
    %1315 = vmatprep.mubr.f32.mxu0 0.0
    %1316 = vmatmul.mubr.f32.gmra.mrb[0].mxu0 %v1198
    %v1317 = vpop.f32.mrb[0].mxu0
    %v1318 = vadd.f32 %v1185, %v1317
    %v1319 = vpop.f32.mrb[0].mxu0
    %1320 = vmatprep.mubr.f32.mxu0 0.0
    %1321 = vmatmul.mubr.f32.gmra.mrb[0].mxu0 %v1201
    %v1322 = vpop.f32.mrb[0].mxu0
    %v1323 = vadd.f32 %v1185, %v1322
    %v1324 = vpop.f32.mrb[0].mxu0
    %1325 = vmatprep.mubr.f32.mxu0 0.0
    %1326 = vmatmul.mubr.f32.gmra.mrb[0].mxu0 %v1204
    %v1327 = vpop.f32.mrb[0].mxu0
    %v1328 = vadd.f32 %v1185, %v1327
    %v1329 = vpop.f32.mrb[0].mxu0
    %1330 = vmatprep.mubr.f32.mxu0 0.0
    %1331 = vmatmul.mubr.f32.gmra.mrb[0].mxu0 %v1207
    %v1332 = vpop.f32.mrb[0].mxu0
    %v1333 = vadd.f32 %v1185, %v1332
    %v1334 = vpop.f32.mrb[0].mxu0
    %1335 = vmatprep.mubr.f32.mxu0 0.0
    %1336 = vmatmul.mubr.f32.gmra.mrb[0].mxu0 %v1210
    %v1337 = vpop.f32.mrb[0].mxu0
    %v1338 = vadd.f32 %v1185, %v1337
    %v1339 = vpop.f32.mrb[0].mxu0
    %1340 = vmatprep.mubr.f32.mxu0 0.0
    %1341 = vmatmul.mubr.f32.gmra.mrb[0].mxu0 %v1213
    %v1342 = vpop.f32.mrb[0].mxu0
    %v1343 = vadd.f32 %v1185, %v1342
    %v1344 = vpop.f32.mrb[0].mxu0
    %1345 = vmatprep.mubr.f32.mxu0 0.0
    %1346 = vmatmul.mubr.f32.gmra.mrb[0].mxu0 %v1216
    %v1347 = vpop.f32.mrb[0].mxu0
    %v1348 = vadd.f32 %v1185, %v1347
    %v1349 = vpop.f32.mrb[0].mxu0
    %1350 = vmatprep.mubr.f32.mxu0 0.0
    %1351 = vmatmul.mubr.f32.gmra.mrb[0].mxu0 %v1219
    %v1352 = vpop.f32.mrb[0].mxu0
    %v1353 = vadd.f32 %v1185, %v1352
    %v1354 = vpop.f32.mrb[0].mxu0
    %1355 = vmatprep.mubr.f32.mxu0 0.0
    %1356 = vmatmul.mubr.f32.gmra.mrb[0].mxu0 %v1222
    %v1357 = vpop.f32.mrb[0].mxu0
    %v1358 = vadd.f32 %v1185, %v1357
    %v1359 = vpop.f32.mrb[0].mxu0
    %1360 = vmatprep.mubr.f32.mxu0 0.0
    %1361 = vmatmul.mubr.f32.gmra.mrb[0].mxu0 %v1225
    %v1362 = vpop.f32.mrb[0].mxu0
    %v1363 = vadd.f32 %v1185, %v1362
    %v1364 = vpop.f32.mrb[0].mxu0
    %1365 = vmatprep.mubr.f32.mxu0 0.0
    %1366 = vmatmul.mubr.f32.gmra.mrb[0].mxu0 %v1228
    %v1367 = vpop.f32.mrb[0].mxu0
    %v1368 = vadd.f32 %v1185, %v1367
    %v1369 = vpop.f32.mrb[0].mxu0
    %1370 = vmatprep.mubr.f32.mxu0 0.0
    %1371 = vmatmul.mubr.f32.gmra.mrb[0].mxu0 %v1231
    %v1372 = vpop.f32.mrb[0].mxu0
    %v1373 = vadd.f32 %v1185, %v1372
    %v1374 = vpop.f32.mrb[0].mxu0
    %1375 = vmatprep.mubr.f32.mxu0 0.0
    %1376 = vmatmul.mubr.f32.gmra.mrb[0].mxu0 %v1234
    %v1377 = vpop.f32.mrb[0].mxu0
    %v1378 = vadd.f32 %v1185, %v1377
    %v1379 = vpop.f32.mrb[0].mxu0
    %1380 = vdwg.mxu0
    %v1381 = vmax.f32 %v1303, 0.0
    %v1382 = vmax.f32 %v1308, 0.0
    %v1383 = vmax.f32 %v1313, 0.0
    %v1384 = vmax.f32 %v1318, 0.0
    %v1385 = vmax.f32 %v1323, 0.0
    %v1386 = vmax.f32 %v1328, 0.0
    %v1387 = vmax.f32 %v1333, 0.0
    %v1388 = vmax.f32 %v1338, 0.0
    %v1389 = vmax.f32 %v1343, 0.0
    %v1390 = vmax.f32 %v1348, 0.0
    %v1391 = vmax.f32 %v1353, 0.0
    %v1392 = vmax.f32 %v1358, 0.0
    %v1393 = vmax.f32 %v1363, 0.0
    %v1394 = vmax.f32 %v1368, 0.0
    %v1395 = vmax.f32 %v1373, 0.0
    %v1396 = vmax.f32 %v1378, 0.0
    %v1397 = vld [vmem:[%s10] sm:$0xff]
    %v1398 = vld [vmem:[%s10 + $0x8] sm:$0xff]
    %v1399 = vld [vmem:[%s11] sm:$0x1]
    %v1401 = vlaneseq
    %v1402 = vshrl.u32 %v1401, 7
    %v1403 = vsub.s32 0, %v1402
    %v1404 = vrot.slane %v1399, %v1403
    %v1407 = vsel %vm1187, %v1381, 0
    %v1410 = vsel %vm1187, %v1382, 0
    %v1413 = vsel %vm1187, %v1383, 0
    %v1416 = vsel %vm1187, %v1384, 0
    %v1419 = vsel %vm1187, %v1385, 0
    %v1422 = vsel %vm1187, %v1386, 0
    %v1425 = vsel %vm1187, %v1387, 0
    %v1428 = vsel %vm1187, %v1388, 0
    %v1431 = vsel %vm1187, %v1389, 0
    %v1434 = vsel %vm1187, %v1390, 0
    %v1437 = vsel %vm1187, %v1391, 0
    %v1440 = vsel %vm1187, %v1392, 0
    %v1443 = vsel %vm1187, %v1393, 0
    %v1446 = vsel %vm1187, %v1394, 0
    %v1449 = vsel %vm1187, %v1395, 0
    %v1452 = vsel %vm1187, %v1396, 0
    %1454 = vmatprep.subr.mxu0 0.0
    %1455 = vmatpush1.msra.mxu0 %v1397
    %1456 = vmatprep.subr.mxu0 0.0
    %1457 = vmatpush1.msra.mxu0 %v1398
    %1458 = vmatprep.subr.mxu0 0.0
    %1459 = vmatpush1.msra.mxu0 0.0
    %1460 = vmatprep.subr.mxu0 0.0
    %1461 = vmatpush1.msra.mxu0 0.0
    %1462 = vmatprep.subr.mxu0 0.0
    %1463 = vmatpush1.msra.mxu0 0.0
    %1464 = vmatprep.subr.mxu0 0.0
    %1465 = vmatpush1.msra.mxu0 0.0
    %1466 = vmatprep.subr.mxu0 0.0
    %1467 = vmatpush1.msra.mxu0 0.0
    %1468 = vmatprep.subr.mxu0 0.0
    %1469 = vmatpush1.msra.mxu0 0.0
    %1470 = vmatprep.subr.mxu0 0.0
    %1471 = vmatpush1.msra.mxu0 0.0
    %1472 = vmatprep.subr.mxu0 0.0
    %1473 = vmatpush1.msra.mxu0 0.0
    %1474 = vmatprep.subr.mxu0 0.0
    %1475 = vmatpush1.msra.mxu0 0.0
    %1476 = vmatprep.subr.mxu0 0.0
    %1477 = vmatpush1.msra.mxu0 0.0
    %1478 = vmatprep.subr.mxu0 0.0
    %1479 = vmatpush1.msra.mxu0 0.0
    %1480 = vmatprep.subr.mxu0 0.0
    %1481 = vmatpush1.msra.mxu0 0.0
    %1482 = vmatprep.subr.mxu0 0.0
    %1483 = vmatpush1.msra.mxu0 0.0
    %1484 = vmatprep.subr.mxu0 0.0
    %1485 = vmatpush1.msra.mxu0 0.0
    %1486 = vmatprep.subr.mxu0 0.0
    %1487 = vmatpush1.msra.mxu0 0.0
    %1488 = vmatprep.subr.mxu0 0.0
    %1489 = vmatpush1.msra.mxu0 0.0
    %1490 = vmatprep.subr.mxu0 0.0
    %1491 = vmatpush1.msra.mxu0 0.0
    %1492 = vmatprep.subr.mxu0 0.0
    %1493 = vmatpush1.msra.mxu0 0.0
    %1494 = vmatprep.subr.mxu0 0.0
    %1495 = vmatpush1.msra.mxu0 0.0
    %1496 = vmatprep.subr.mxu0 0.0
    %1497 = vmatpush1.msra.mxu0 0.0
    %1498 = vmatprep.subr.mxu0 0.0
    %1499 = vmatpush1.msra.mxu0 0.0
    %1500 = vmatprep.subr.mxu0 0.0
    %1501 = vmatpush1.msra.mxu0 0.0
    %1502 = vmatprep.subr.mxu0 0.0
    %1503 = vmatpush1.msra.mxu0 0.0
    %1504 = vmatprep.subr.mxu0 0.0
    %1505 = vmatpush1.msra.mxu0 0.0
    %1506 = vmatprep.subr.mxu0 0.0
    %1507 = vmatpush1.msra.mxu0 0.0
    %1508 = vmatprep.subr.mxu0 0.0
    %1509 = vmatpush1.msra.mxu0 0.0
    %1510 = vmatprep.subr.mxu0 0.0
    %1511 = vmatpush1.msra.mxu0 0.0
    %1512 = vmatprep.subr.mxu0 0.0
    %1513 = vmatpush1.msra.mxu0 0.0
    %1514 = vmatprep.subr.mxu0 0.0
    %1515 = vmatpush1.msra.mxu0 0.0
    %1516 = vmatprep.subr.mxu0 0.0
    %1517 = vmatpush1.msra.mxu0 0.0
    %1518 = vmatprep.mubr.f32.mxu0 0.0
    %1519 = vmatmul.mubr.f32.gmra.mrb[0].mxu0 %v1407
    %v1520 = vpop.f32.mrb[0].mxu0
    %v1521 = vadd.f32 %v1404, %v1520
    %v1522 = vpop.f32.mrb[0].mxu0
    %1523 = vmatprep.mubr.f32.mxu0 0.0
    %1524 = vmatmul.mubr.f32.gmra.mrb[0].mxu0 %v1410
    %v1525 = vpop.f32.mrb[0].mxu0
    %v1526 = vadd.f32 %v1404, %v1525
    %v1527 = vpop.f32.mrb[0].mxu0
    %1528 = vmatprep.mubr.f32.mxu0 0.0
    %1529 = vmatmul.mubr.f32.gmra.mrb[0].mxu0 %v1413
    %v1530 = vpop.f32.mrb[0].mxu0
    %v1531 = vadd.f32 %v1404, %v1530
    %v1532 = vpop.f32.mrb[0].mxu0
    %1533 = vmatprep.mubr.f32.mxu0 0.0
    %1534 = vmatmul.mubr.f32.gmra.mrb[0].mxu0 %v1416
    %v1535 = vpop.f32.mrb[0].mxu0
    %v1536 = vadd.f32 %v1404, %v1535
    %v1537 = vpop.f32.mrb[0].mxu0
    %1538 = vmatprep.mubr.f32.mxu0 0.0
    %1539 = vmatmul.mubr.f32.gmra.mrb[0].mxu0 %v1419
    %v1540 = vpop.f32.mrb[0].mxu0
    %v1541 = vadd.f32 %v1404, %v1540
    %v1542 = vpop.f32.mrb[0].mxu0
    %1543 = vmatprep.mubr.f32.mxu0 0.0
    %1544 = vmatmul.mubr.f32.gmra.mrb[0].mxu0 %v1422
    %v1545 = vpop.f32.mrb[0].mxu0
    %v1546 = vadd.f32 %v1404, %v1545
    %v1547 = vpop.f32.mrb[0].mxu0
    %1548 = vmatprep.mubr.f32.mxu0 0.0
    %1549 = vmatmul.mubr.f32.gmra.mrb[0].mxu0 %v1425
    %v1550 = vpop.f32.mrb[0].mxu0
    %v1551 = vadd.f32 %v1404, %v1550
    %v1552 = vpop.f32.mrb[0].mxu0
    %1553 = vmatprep.mubr.f32.mxu0 0.0
    %1554 = vmatmul.mubr.f32.gmra.mrb[0].mxu0 %v1428
    %v1555 = vpop.f32.mrb[0].mxu0
    %v1556 = vadd.f32 %v1404, %v1555
    %v1557 = vpop.f32.mrb[0].mxu0
    %1558 = vmatprep.mubr.f32.mxu0 0.0
    %1559 = vmatmul.mubr.f32.gmra.mrb[0].mxu0 %v1431
    %v1560 = vpop.f32.mrb[0].mxu0
    %v1561 = vadd.f32 %v1404, %v1560
    %v1562 = vpop.f32.mrb[0].mxu0
    %1563 = vmatprep.mubr.f32.mxu0 0.0
    %1564 = vmatmul.mubr.f32.gmra.mrb[0].mxu0 %v1434
    %v1565 = vpop.f32.mrb[0].mxu0
    %v1566 = vadd.f32 %v1404, %v1565
    %v1567 = vpop.f32.mrb[0].mxu0
    %1568 = vmatprep.mubr.f32.mxu0 0.0
    %1569 = vmatmul.mubr.f32.gmra.mrb[0].mxu0 %v1437
    %v1570 = vpop.f32.mrb[0].mxu0
    %v1571 = vadd.f32 %v1404, %v1570
    %v1572 = vpop.f32.mrb[0].mxu0
    %1573 = vmatprep.mubr.f32.mxu0 0.0
    %1574 = vmatmul.mubr.f32.gmra.mrb[0].mxu0 %v1440
    %v1575 = vpop.f32.mrb[0].mxu0
    %v1576 = vadd.f32 %v1404, %v1575
    %v1577 = vpop.f32.mrb[0].mxu0
    %1578 = vmatprep.mubr.f32.mxu0 0.0
    %1579 = vmatmul.mubr.f32.gmra.mrb[0].mxu0 %v1443
    %v1580 = vpop.f32.mrb[0].mxu0
    %v1581 = vadd.f32 %v1404, %v1580
    %v1582 = vpop.f32.mrb[0].mxu0
    %1583 = vmatprep.mubr.f32.mxu0 0.0
    %1584 = vmatmul.mubr.f32.gmra.mrb[0].mxu0 %v1446
    %v1585 = vpop.f32.mrb[0].mxu0
    %v1586 = vadd.f32 %v1404, %v1585
    %v1587 = vpop.f32.mrb[0].mxu0
    %1588 = vmatprep.mubr.f32.mxu0 0.0
    %1589 = vmatmul.mubr.f32.gmra.mrb[0].mxu0 %v1449
    %v1590 = vpop.f32.mrb[0].mxu0
    %v1591 = vadd.f32 %v1404, %v1590
    %v1592 = vpop.f32.mrb[0].mxu0
    %1593 = vmatprep.mubr.f32.mxu0 0.0
    %1594 = vmatmul.mubr.f32.gmra.mrb[0].mxu0 %v1452
    %v1595 = vpop.f32.mrb[0].mxu0
    %v1596 = vadd.f32 %v1404, %v1595
    %v1597 = vpop.f32.mrb[0].mxu0
    %1598 = vdwg.mxu0
    %v1599 = vadd.f32 %v1521, %v942
    %v1600 = vadd.f32 %v1526, %v943
    %v1601 = vadd.f32 %v1531, %v944
    %v1602 = vadd.f32 %v1536, %v945
    %v1603 = vadd.f32 %v1541, %v946
    %v1604 = vadd.f32 %v1546, %v947
    %v1605 = vadd.f32 %v1551, %v948
    %v1606 = vadd.f32 %v1556, %v949
    %v1607 = vadd.f32 %v1561, %v950
    %v1608 = vadd.f32 %v1566, %v951
    %v1609 = vadd.f32 %v1571, %v952
    %v1610 = vadd.f32 %v1576, %v953
    %v1611 = vadd.f32 %v1581, %v954
    %v1612 = vadd.f32 %v1586, %v955
    %v1613 = vadd.f32 %v1591, %v956
    %v1614 = vadd.f32 %v1596, %v957
    %1615 = vst.msk [vmem:[%s12] sm:$0xff] %vm104, %v1599
    %1616 = vst.msk [vmem:[%s12 + $0x8] sm:$0xff] %vm104, %v1600
    %1617 = vst.msk [vmem:[%s12 + $0x10] sm:$0xff] %vm104, %v1601
    %1618 = vst.msk [vmem:[%s12 + $0x18] sm:$0xff] %vm104, %v1602
    %1619 = vst.msk [vmem:[%s12 + $0x20] sm:$0xff] %vm104, %v1603
    %1620 = vst.msk [vmem:[%s12 + $0x28] sm:$0xff] %vm104, %v1604
    %1621 = vst.msk [vmem:[%s12 + $0x30] sm:$0xff] %vm104, %v1605
    %1622 = vst.msk [vmem:[%s12 + $0x38] sm:$0xff] %vm104, %v1606
    %1623 = vst.msk [vmem:[%s12 + $0x40] sm:$0xff] %vm104, %v1607
    %1624 = vst.msk [vmem:[%s12 + $0x48] sm:$0xff] %vm104, %v1608
    %1625 = vst.msk [vmem:[%s12 + $0x50] sm:$0xff] %vm104, %v1609
    %1626 = vst.msk [vmem:[%s12 + $0x58] sm:$0xff] %vm104, %v1610
    %1627 = vst.msk [vmem:[%s12 + $0x60] sm:$0xff] %vm104, %v1611
    %1628 = vst.msk [vmem:[%s12 + $0x68] sm:$0xff] %vm104, %v1612
    %1629 = vst.msk [vmem:[%s12 + $0x70] sm:$0xff] %vm104, %v1613
    %1630 = vst.msk [vmem:[%s12 + $0x78] sm:$0xff] %vm104, %v1614
    // Predicated region
    $region50: #{tpu_custom_call.1} parent=1 // pred_check
      _
    $region51: #{tpu_custom_call.1} parent=1 // pred_check_branch
      %1632 = sbr.rel (0) target = $region53
    $region52: #{tpu_custom_call.1} parent=1 // pred_region
      _
    $region53: #{tpu_custom_call.1} parent=1 // pred_fallthru
      _
    // Predicated region
    $region54: #{tpu_custom_call.1} parent=1 // pred_check
      _
    $region55: #{tpu_custom_call.1} parent=1 // pred_check_branch
      %1634 = sbr.rel (0) target = $region57
    $region56: #{tpu_custom_call.1} parent=1 // pred_region
      %s1636 = ssub.s32 2048, 2048
      %1637 = vsyncadd [#allocation4], %s1636
      %s1638 = sshll.u32 [#allocation3], 4
      %s1639 = int_to_ptr.vmem [resolvable:$true] %s1638
      %1644 = dma.vmem_to_hbm [thread:$0]  %s1639, 2048, %s13, [#allocation4], 128, 128, 8
    $region57: #{tpu_custom_call.1} parent=1 // pred_fallthru
      _
    // Predicated region
    $region58: #{tpu_custom_call.1} parent=1 // pred_check
      _
    $region59: #{tpu_custom_call.1} parent=1 // pred_check_branch
      %1646 = sbr.rel (0) target = $region61
    $region60: #{tpu_custom_call.1} parent=1 // pred_region
      _
    $region61: #{tpu_custom_call.1} parent=1 // pred_fallthru
      _
    // Predicated region
    $region62: #{tpu_custom_call.1} parent=1 // pred_check
      _
    $region63: #{tpu_custom_call.1} parent=1 // pred_check_branch
      %1648 = sbr.rel (0) target = $region65
    $region64: #{tpu_custom_call.1} parent=1 // pred_region
      %1649 = dma.done [#allocation4], 2048
    $region65: #{tpu_custom_call.1} parent=1 // pred_fallthru
      _
    %1650 = vsyncpa [#allocation4], 1

</llo_original>
